<compile_context>
chip_gen: v6e
topology: v6e:2x2x1
jax: 0.10.0
libtpu: 0.0.40
codegen_flags: <defaults>
</compile_context>

<pallas_src>
import functools
import numpy as np

import jax
import jax.numpy as jnp
from jax import lax
from jax.experimental import pallas as pl
from jax.experimental.pallas import tpu as pltpu


def _round_up(x, m):
    return (x + m - 1) // m * m


# ----------------------------- fused Pallas kernel -----------------------------

def _bottleneck_kernel(xp_ref, w1_ref, b1_ref, w2_ref, b2_ref, w3_ref, b3_ref,
                       out_ref, h1_ref, *, stride, ho, wo8, tap_table, valid_table):
    np_, hs, sw, cin_p = xp_ref.shape
    cmid_p = w1_ref.shape[1]
    cout_p = w3_ref.shape[1]
    p_slab = hs * sw

    w1 = w1_ref[...]
    b1 = b1_ref[...]

    # -- conv1 (grouped 1x1 densified to block-diag, BN1 scale + channel shuffle
    #    folded into the weight) + bias + ReLU, per parity slab, stored to VMEM --
    for p in range(np_):
        xf = xp_ref[p].reshape(p_slab, cin_p)
        h = jnp.dot(xf, w1, preferred_element_type=jnp.float32) + b1
        h = jnp.maximum(h, 0.0).reshape(hs, sw, cmid_p)
        # zero the conv-padding / alignment-filler pixels (so the depthwise sees
        # proper zero padding -- the bias would otherwise leak into the border)
        rlo, rhi, clo, chi = valid_table[p]
        ri = lax.broadcasted_iota(jnp.int32, (hs, sw, 1), 0)
        ci = lax.broadcasted_iota(jnp.int32, (hs, sw, 1), 1)
        okf = ((ri >= rlo) & (ri < rhi) & (ci >= clo) & (ci < chi)).astype(jnp.float32)
        h1_ref[p] = h * okf

    # -- depthwise 3x3 (stride folded into the parity layout) + BN2 + ReLU --
    z = jnp.zeros((ho, wo8, cmid_p), jnp.float32)
    for k, (p, r0, c0) in enumerate(tap_table):
        tap = h1_ref[p, r0:r0 + ho, c0:c0 + wo8, :]
        z = z + tap * w2_ref[k:k + 1, :].reshape(1, 1, cmid_p)
    z = jnp.maximum(z + b2_ref[...].reshape(1, 1, cmid_p), 0.0)

    # -- conv3 (grouped 1x1 densified, BN3 scale folded) + bias --
    y = jnp.dot(z.reshape(ho * wo8, cmid_p), w3_ref[...],
                preferred_element_type=jnp.float32) + b3_ref[...]

    # -- shortcut + final ReLU --
    if stride == 1:
        res = xp_ref[0, 1:1 + ho, 1:1 + wo8, :].reshape(ho * wo8, cin_p)
        out_ref[0] = jnp.maximum(y + res, 0.0)
    else:
        # AvgPool2d(3, stride=2, padding=1), count_include_pad=True
        r = jnp.zeros((ho, wo8, cin_p), jnp.float32)
        for (p, r0, c0) in tap_table:
            r = r + xp_ref[p, r0:r0 + ho, c0:c0 + wo8, :]
        rf = (r * (1.0 / 9.0)).reshape(ho * wo8, cin_p)
        out_ref[0, :, :cout_p] = jnp.maximum(y, 0.0)      # lane-aligned slabs
        out_ref[0, :, cout_p:] = jnp.maximum(rf, 0.0)


# ----------------------------- glue (plain JAX) -----------------------------

def _fold_bn(bn, eps=1e-5):
    scale = bn["gamma"] / jnp.sqrt(bn["var"] + eps)
    bias = bn["beta"] - bn["mean"] * scale
    return scale, bias


def _densify_grouped_1x1(w, cin, cout, groups):
    """Grouped 1x1 conv weight (cout, cin//groups, 1, 1) -> dense block-diagonal
    (cin, cout) matmul weight."""
    w2d = w.reshape(cout, cin // groups)
    cin_g, cout_g = cin // groups, cout // groups
    dense = jnp.zeros((cin, cout), jnp.float32)
    for gi in range(groups):
        blk = w2d[gi * cout_g:(gi + 1) * cout_g, :]           # (cout_g, cin_g)
        dense = dense.at[gi * cin_g:(gi + 1) * cin_g,
                         gi * cout_g:(gi + 1) * cout_g].set(blk.T)
    return dense


def _prep_geometry(H, W, stride):
    """Static geometry + tap/valid tables for the fused kernel."""
    if stride == 1:
        Ho, Wo = H, W
        Wo8 = _round_up(Wo, 8)
        SW = _round_up(Wo8 + 2, 8)
        Hs = H + 2
        NP = 1
        taps = [(0, kh, kw) for kh in range(3) for kw in range(3)]
        valid = [(1, H + 1, 1, W + 1)]
    else:
        assert H % 2 == 0 and W % 2 == 0, "stride=2 path assumes even H, W"
        Ho, Wo = H // 2, W // 2
        Wo8 = _round_up(Wo, 8)
        SW = _round_up(Wo8 + 1, 8)
        Hs = Ho + 1
        NP = 4

        def pk(k):                         # kernel offset -> (parity, slab offset)
            return ((1, 0), (0, 0), (1, 1))[k]

        taps = []
        for kh in range(3):
            pr, r0 = pk(kh)
            for kw in range(3):
                pc, c0 = pk(kw)
                taps.append((2 * pr + pc, r0, c0))
        valid = []
        for pr in (0, 1):
            for pc in (0, 1):
                rlo, rhi = (1, Ho + 1) if pr else (0, Ho)
                clo, chi = (1, Wo + 1) if pc else (0, Wo)
                valid.append((rlo, rhi, clo, chi))
    return NP, Hs, SW, Ho, Wo, Wo8, taps, valid


def _pack_input(x_nhwc, stride, SW, Wo, cin_pad):
    """Pad (and, for stride=2, parity-split) x.  No data expansion beyond halo."""
    N, H, W, C = x_nhwc.shape
    if stride == 1:
        Hs = H + 2
        xp = jnp.pad(x_nhwc, ((0, 0), (1, 1), (1, SW - W - 1), (0, cin_pad - C)))
        return xp.reshape(N, Hs, SW, cin_pad)
    slabs = []
    for pr in (0, 1):
        for pc in (0, 1):
            sub = x_nhwc[:, pr::2, pc::2, :]
            rpad = (1, 0) if pr else (0, 1)
            cpad = (1, SW - Wo - 1) if pc else (0, SW - Wo)
            slabs.append(jnp.pad(sub, ((0, 0), rpad, cpad, (0, cin_pad - C))))
    xp = jnp.stack(slabs, axis=1)                          # (N, 4, Hs, SW, C_pad)
    return xp.reshape(N * 4, xp.shape[2], SW, cin_pad)


def init_params(key, in_c, out_c, groups):
    """Deterministic synthetic parameters matching the torch module's shapes."""
    mid_c = out_c // 4
    g = 1 if in_c == 24 else groups
    ks = jax.random.split(key, 6)
    p = {
        "w1": 0.2 * jax.random.normal(ks[0], (mid_c, in_c // g, 1, 1), jnp.float32),
        "w2": 0.2 * jax.random.normal(ks[1], (mid_c, 1, 3, 3), jnp.float32),
        "w3": 0.2 * jax.random.normal(ks[2], (out_c, mid_c // groups, 1, 1), jnp.float32),
    }

    def bn(k, c):
        k1, k2, k3, k4 = jax.random.split(k, 4)
        return dict(gamma=1.0 + 0.1 * jax.random.normal(k1, (c,), jnp.float32),
                    beta=0.1 * jax.random.normal(k2, (c,), jnp.float32),
                    mean=0.1 * jax.random.normal(k3, (c,), jnp.float32),
                    var=0.5 + 0.2 * jax.random.uniform(k4, (c,), jnp.float32))

    p["bn1"] = bn(ks[3], mid_c)
    p["bn2"] = bn(ks[4], mid_c)
    p["bn3"] = bn(ks[5], out_c)
    return p, g


def bottleneck_forward(x_nchw, params, *, in_c, out_c, stride, groups, g):
    mid_c = out_c // 4
    N, _, H, W = x_nchw.shape

    cin_p = _round_up(in_c, 128)
    cmid_p = _round_up(mid_c, 128)
    cout_p = _round_up(out_c, 128)

    # ---- fold BN scales / shuffle / grouping into dense padded weights ----
    s1, b1 = _fold_bn(params["bn1"])
    s2, b2 = _fold_bn(params["bn2"])
    s3, b3 = _fold_bn(params["bn3"])

    w1d = _densify_grouped_1x1(params["w1"], in_c, mid_c, g) * s1[None, :]
    perm = np.arange(mid_c).reshape(g, mid_c // g).T.reshape(-1)   # ShuffleBlock(g)
    w1d = w1d[:, perm]
    b1p = b1[perm]
    w2f = jnp.transpose(params["w2"].reshape(mid_c, 3, 3), (1, 2, 0)).reshape(9, mid_c)
    w2f = w2f * s2[None, :]
    w3d = _densify_grouped_1x1(params["w3"], mid_c, out_c, groups) * s3[None, :]

    W1 = jnp.zeros((cin_p, cmid_p), jnp.float32).at[:in_c, :mid_c].set(w1d)
    B1 = jnp.zeros((1, cmid_p), jnp.float32).at[0, :mid_c].set(b1p)
    W2 = jnp.zeros((9, cmid_p), jnp.float32).at[:, :mid_c].set(w2f)
    B2 = jnp.zeros((1, cmid_p), jnp.float32).at[0, :mid_c].set(b2)
    W3 = jnp.zeros((cmid_p, cout_p), jnp.float32).at[:mid_c, :out_c].set(w3d)
    B3 = jnp.zeros((1, cout_p), jnp.float32).at[0, :out_c].set(b3)

    NP, Hs, SW, Ho, Wo, Wo8, taps, valid = _prep_geometry(H, W, stride)
    x_nhwc = jnp.transpose(x_nchw, (0, 2, 3, 1)).astype(jnp.float32)
    xp = _pack_input(x_nhwc, stride, SW, Wo, cin_p)

    if stride == 1:
        assert in_c == out_c, "stride=1 residual requires in_c == out_c"
        ctot = cout_p
    else:
        ctot = cout_p + cin_p
    q8 = Ho * Wo8

    kern = functools.partial(_bottleneck_kernel, stride=stride, ho=Ho, wo8=Wo8,
                             tap_table=taps, valid_table=valid)

    out = pl.pallas_call(
        kern,
        out_shape=jax.ShapeDtypeStruct((N, q8, ctot), jnp.float32),
        grid=(N,),
        in_specs=[
            pl.BlockSpec((NP, Hs, SW, cin_p), lambda n: (n, 0, 0, 0)),
            pl.BlockSpec((cin_p, cmid_p), lambda n: (0, 0)),
            pl.BlockSpec((1, cmid_p), lambda n: (0, 0)),
            pl.BlockSpec((9, cmid_p), lambda n: (0, 0)),
            pl.BlockSpec((1, cmid_p), lambda n: (0, 0)),
            pl.BlockSpec((cmid_p, cout_p), lambda n: (0, 0)),
            pl.BlockSpec((1, cout_p), lambda n: (0, 0)),
        ],
        out_specs=pl.BlockSpec((1, q8, ctot), lambda n: (n, 0, 0)),
        scratch_shapes=[pltpu.VMEM((NP, Hs, SW, cmid_p), jnp.float32)],
        compiler_params=pltpu.CompilerParams(
            dimension_semantics=("parallel",),
            vmem_limit_bytes=32 * 1024 * 1024),
    )(xp, W1, B1, W2, B2, W3, B3)

    # strip spatial / channel padding and return NCHW (like PyTorch)
    out = out.reshape(N, Ho, Wo8, ctot)[:, :, :Wo, :]
    main = out[..., :out_c]
    if stride == 2:
        res = out[..., cout_p:cout_p + in_c]
        out_nhwc = jnp.concatenate([main, res], axis=-1)
    else:
        out_nhwc = main
    return jnp.transpose(out_nhwc, (0, 3, 1, 2))


# ----------------------------- pure-JAX reference -----------------------------

def bottleneck_ref(x, params, *, in_c, out_c, stride, groups, g, eps=1e-5):
    mid_c = out_c // 4
    dn = ("NCHW", "OIHW", "NCHW")

    def bn_apply(h, bn):
        scale = bn["gamma"] / jnp.sqrt(bn["var"] + eps)
        bias = bn["beta"] - bn["mean"] * scale
        return h * scale[None, :, None, None] + bias[None, :, None, None]

    out = lax.conv_general_dilated(x, params["w1"], (1, 1), "VALID",
                                   feature_group_count=g, dimension_numbers=dn)
    out = jax.nn.relu(bn_apply(out, params["bn1"]))
    N, C, H, W = out.shape
    out = out.reshape(N, g, C // g, H, W).transpose(0, 2, 1, 3, 4).reshape(N, C, H, W)
    out = lax.conv_general_dilated(out, params["w2"], (stride, stride),
                                   ((1, 1), (1, 1)), feature_group_count=mid_c,
                                   dimension_numbers=dn)
    out = jax.nn.relu(bn_apply(out, params["bn2"]))
    out = lax.conv_general_dilated(out, params["w3"], (1, 1), "VALID",
                                   feature_group_count=groups, dimension_numbers=dn)
    out = bn_apply(out, params["bn3"])
    if stride == 2:
        res = lax.reduce_window(x, 0.0, lax.add, (1, 1, 3, 3), (1, 1, 2, 2),
                                ((0, 0), (0, 0), (1, 1), (1, 1))) / 9.0
        out = jax.nn.relu(jnp.concatenate([out, res], axis=1))
    else:
        out = jax.nn.relu(out + x)
    return out


# ----------------------------- main -----------------------------

if __name__ == "__main__":
    key = jax.random.PRNGKey(0)

    configs = [
        dict(N=2, H=8, W=8, in_c=16, out_c=16, stride=1, groups=2),
        dict(N=2, H=8, W=8, in_c=16, out_c=32, stride=2, groups=2),
    ]
    for cfg in configs:
        kx, kp, key = jax.random.split(key, 3)
        x = jax.random.normal(kx, (cfg["N"], cfg["in_c"], cfg["H"], cfg["W"]),
                              jnp.float32)
        params, g = init_params(kp, cfg["in_c"], cfg["out_c"], cfg["groups"])

        out = bottleneck_forward(x, params, in_c=cfg["in_c"], out_c=cfg["out_c"],
                                 stride=cfg["stride"], groups=cfg["groups"], g=g)
        out = jax.block_until_ready(out)

        ref = bottleneck_ref(x, params, in_c=cfg["in_c"], out_c=cfg["out_c"],
                             stride=cfg["stride"], groups=cfg["groups"], g=g)
        np.testing.assert_allclose(np.asarray(out), np.asarray(ref),
                                   rtol=1e-4, atol=1e-4)
    print("KERNEL_OK")
</pallas_src>

<mosaic_0001>
module attributes {stable_mosaic.version = 11 : i64} {
  func.func @_bottleneck_kernel(%arg0: i32, %arg1: memref<1x10x16x128xf32, #tpu.memory_space<vmem>>, %arg2: memref<128x128xf32, #tpu.memory_space<vmem>>, %arg3: memref<1x128xf32, #tpu.memory_space<vmem>>, %arg4: memref<9x128xf32, #tpu.memory_space<vmem>>, %arg5: memref<1x128xf32, #tpu.memory_space<vmem>>, %arg6: memref<128x128xf32, #tpu.memory_space<vmem>>, %arg7: memref<1x128xf32, #tpu.memory_space<vmem>>, %arg8: memref<1x64x128xf32, #tpu.memory_space<vmem>>, %arg9: memref<1x10x16x128xf32, #tpu.memory_space<vmem>>) attributes {dimension_semantics = [#tpu.dimension_semantics<parallel>], iteration_bounds = array<i64: 2>, scalar_prefetch = 0 : i64, scratch_operands = 1 : i64, tpu.core_type = #tpu.core_type<tc>, window_params = [{transform_indices = @transform_0, window_bounds = array<i64: 1, 10, 16, 128>}, {pipeline_mode = #tpu.pipeline_mode<synchronous>, transform_indices = @transform_1, window_bounds = array<i64: 128, 128>}, {pipeline_mode = #tpu.pipeline_mode<synchronous>, transform_indices = @transform_2, window_bounds = array<i64: 1, 128>}, {pipeline_mode = #tpu.pipeline_mode<synchronous>, transform_indices = @transform_3, window_bounds = array<i64: 9, 128>}, {pipeline_mode = #tpu.pipeline_mode<synchronous>, transform_indices = @transform_4, window_bounds = array<i64: 1, 128>}, {pipeline_mode = #tpu.pipeline_mode<synchronous>, transform_indices = @transform_5, window_bounds = array<i64: 128, 128>}, {pipeline_mode = #tpu.pipeline_mode<synchronous>, transform_indices = @transform_6, window_bounds = array<i64: 1, 128>}, {transform_indices = @transform_7, window_bounds = array<i64: 1, 64, 128>}]} {
    %c0 = arith.constant 0 : index
    %c0_0 = arith.constant 0 : index
    %0 = vector.load %arg2[%c0, %c0_0] : memref<128x128xf32, #tpu.memory_space<vmem>>, vector<128x128xf32>
    %c0_1 = arith.constant 0 : index
    %c0_2 = arith.constant 0 : index
    %1 = vector.load %arg3[%c0_1, %c0_2] : memref<1x128xf32, #tpu.memory_space<vmem>>, vector<1x128xf32>
    %c0_3 = arith.constant 0 : index
    %c0_4 = arith.constant 0 : index
    %c0_5 = arith.constant 0 : index
    %c0_6 = arith.constant 0 : index
    %2 = vector.load %arg1[%c0_3, %c0_4, %c0_5, %c0_6] : memref<1x10x16x128xf32, #tpu.memory_space<vmem>>, vector<1x10x16x128xf32>
    %3 = vector.shape_cast %2 : vector<1x10x16x128xf32> to vector<10x16x128xf32>
    %4 = vector.shape_cast %3 : vector<10x16x128xf32> to vector<160x128xf32>
    %cst = arith.constant dense<0.000000e+00> : vector<160x128xf32>
    %5 = tpu.matmul %4, %0, %cst {dimension_numbers = #tpu.dot_dimension_numbers<[1], [0], [0], [1], [0, 0, 1, 1], [], []>} : vector<160x128xf32>, vector<128x128xf32>, vector<160x128xf32> -> vector<160x128xf32>
    %6 = vector.broadcast %1 : vector<1x128xf32> to vector<160x128xf32>
    %7 = arith.addf %5, %6 : vector<160x128xf32>
    %cst_7 = arith.constant 0.000000e+00 : f32
    %8 = vector.broadcast %cst_7 : f32 to vector<160x128xf32>
    %9 = arith.maximumf %7, %8 : vector<160x128xf32>
    %10 = vector.shape_cast %9 : vector<160x128xf32> to vector<10x16x128xf32>
    %11 = tpu.iota {dimensions = array<i32: 0>} : vector<10x16x1xi32>
    %12 = tpu.iota {dimensions = array<i32: 1>} : vector<10x16x1xi32>
    %c1_i32 = arith.constant 1 : i32
    %13 = vector.broadcast %c1_i32 : i32 to vector<10x16x1xi32>
    %14 = arith.cmpi sge, %11, %13 : vector<10x16x1xi32>
    %c9_i32 = arith.constant 9 : i32
    %15 = vector.broadcast %c9_i32 : i32 to vector<10x16x1xi32>
    %16 = arith.cmpi slt, %11, %15 : vector<10x16x1xi32>
    %17 = arith.andi %14, %16 : vector<10x16x1xi1>
    %c1_i32_8 = arith.constant 1 : i32
    %18 = vector.broadcast %c1_i32_8 : i32 to vector<10x16x1xi32>
    %19 = arith.cmpi sge, %12, %18 : vector<10x16x1xi32>
    %20 = arith.andi %17, %19 : vector<10x16x1xi1>
    %c9_i32_9 = arith.constant 9 : i32
    %21 = vector.broadcast %c9_i32_9 : i32 to vector<10x16x1xi32>
    %22 = arith.cmpi slt, %12, %21 : vector<10x16x1xi32>
    %23 = arith.andi %20, %22 : vector<10x16x1xi1>
    %24 = arith.extui %23 : vector<10x16x1xi1> to vector<10x16x1xi32>
    %25 = arith.sitofp %24 : vector<10x16x1xi32> to vector<10x16x1xf32>
    %26 = vector.broadcast %25 : vector<10x16x1xf32> to vector<10x16x128xf32>
    %27 = arith.mulf %10, %26 : vector<10x16x128xf32>
    %c0_10 = arith.constant 0 : index
    %c0_11 = arith.constant 0 : index
    %c0_12 = arith.constant 0 : index
    %c0_13 = arith.constant 0 : index
    %28 = vector.load %arg9[%c0_10, %c0_11, %c0_12, %c0_13] : memref<1x10x16x128xf32, #tpu.memory_space<vmem>>, vector<1x10x16x128xf32>
    %29 = vector.shape_cast %28 : vector<1x10x16x128xf32> to vector<10x16x128xf32>
    %30 = vector.shape_cast %27 : vector<10x16x128xf32> to vector<1x10x16x128xf32>
    tpu.vector_store %arg9[%c0_10, %c0_11, %c0_12, %c0_13], %30 {strides = array<i32>} : memref<1x10x16x128xf32, #tpu.memory_space<vmem>>, vector<1x10x16x128xf32>,
    %cst_14 = arith.constant 0.000000e+00 : f32
    %31 = vector.broadcast %cst_14 : f32 to vector<8x8x128xf32>
    %c0_15 = arith.constant 0 : index
    %c0_16 = arith.constant 0 : index
    %c0_17 = arith.constant 0 : index
    %c0_18 = arith.constant 0 : index
    %32 = vector.load %arg9[%c0_15, %c0_16, %c0_17, %c0_18] : memref<1x10x16x128xf32, #tpu.memory_space<vmem>>, vector<1x8x8x128xf32>
    %33 = vector.shape_cast %32 : vector<1x8x8x128xf32> to vector<8x8x128xf32>
    %c0_19 = arith.constant 0 : index
    %c0_20 = arith.constant 0 : index
    %34 = vector.load %arg4[%c0_19, %c0_20] : memref<9x128xf32, #tpu.memory_space<vmem>>, vector<1x128xf32>
    %35 = vector.shape_cast %34 : vector<1x128xf32> to vector<1x1x128xf32>
    %36 = vector.broadcast %35 : vector<1x1x128xf32> to vector<8x8x128xf32>
    %37 = arith.mulf %33, %36 : vector<8x8x128xf32>
    %38 = arith.addf %31, %37 : vector<8x8x128xf32>
    %c0_21 = arith.constant 0 : index
    %c0_22 = arith.constant 0 : index
    %c1 = arith.constant 1 : index
    %c0_23 = arith.constant 0 : index
    %39 = vector.load %arg9[%c0_21, %c0_22, %c1, %c0_23] : memref<1x10x16x128xf32, #tpu.memory_space<vmem>>, vector<1x8x8x128xf32>
    %40 = vector.shape_cast %39 : vector<1x8x8x128xf32> to vector<8x8x128xf32>
    %c1_24 = arith.constant 1 : index
    %c0_25 = arith.constant 0 : index
    %41 = vector.load %arg4[%c1_24, %c0_25] : memref<9x128xf32, #tpu.memory_space<vmem>>, vector<1x128xf32>
    %42 = vector.shape_cast %41 : vector<1x128xf32> to vector<1x1x128xf32>
    %43 = vector.broadcast %42 : vector<1x1x128xf32> to vector<8x8x128xf32>
    %44 = arith.mulf %40, %43 : vector<8x8x128xf32>
    %45 = arith.addf %38, %44 : vector<8x8x128xf32>
    %c0_26 = arith.constant 0 : index
    %c0_27 = arith.constant 0 : index
    %c2 = arith.constant 2 : index
    %c0_28 = arith.constant 0 : index
    %46 = vector.load %arg9[%c0_26, %c0_27, %c2, %c0_28] : memref<1x10x16x128xf32, #tpu.memory_space<vmem>>, vector<1x8x8x128xf32>
    %47 = vector.shape_cast %46 : vector<1x8x8x128xf32> to vector<8x8x128xf32>
    %c2_29 = arith.constant 2 : index
    %c0_30 = arith.constant 0 : index
    %48 = vector.load %arg4[%c2_29, %c0_30] : memref<9x128xf32, #tpu.memory_space<vmem>>, vector<1x128xf32>
    %49 = vector.shape_cast %48 : vector<1x128xf32> to vector<1x1x128xf32>
    %50 = vector.broadcast %49 : vector<1x1x128xf32> to vector<8x8x128xf32>
    %51 = arith.mulf %47, %50 : vector<8x8x128xf32>
    %52 = arith.addf %45, %51 : vector<8x8x128xf32>
    %c0_31 = arith.constant 0 : index
    %c1_32 = arith.constant 1 : index
    %c0_33 = arith.constant 0 : index
    %c0_34 = arith.constant 0 : index
    %53 = vector.load %arg9[%c0_31, %c1_32, %c0_33, %c0_34] : memref<1x10x16x128xf32, #tpu.memory_space<vmem>>, vector<1x8x8x128xf32>
    %54 = vector.shape_cast %53 : vector<1x8x8x128xf32> to vector<8x8x128xf32>
    %c3 = arith.constant 3 : index
    %c0_35 = arith.constant 0 : index
    %55 = vector.load %arg4[%c3, %c0_35] : memref<9x128xf32, #tpu.memory_space<vmem>>, vector<1x128xf32>
    %56 = vector.shape_cast %55 : vector<1x128xf32> to vector<1x1x128xf32>
    %57 = vector.broadcast %56 : vector<1x1x128xf32> to vector<8x8x128xf32>
    %58 = arith.mulf %54, %57 : vector<8x8x128xf32>
    %59 = arith.addf %52, %58 : vector<8x8x128xf32>
    %c0_36 = arith.constant 0 : index
    %c1_37 = arith.constant 1 : index
    %c1_38 = arith.constant 1 : index
    %c0_39 = arith.constant 0 : index
    %60 = vector.load %arg9[%c0_36, %c1_37, %c1_38, %c0_39] : memref<1x10x16x128xf32, #tpu.memory_space<vmem>>, vector<1x8x8x128xf32>
    %61 = vector.shape_cast %60 : vector<1x8x8x128xf32> to vector<8x8x128xf32>
    %c4 = arith.constant 4 : index
    %c0_40 = arith.constant 0 : index
    %62 = vector.load %arg4[%c4, %c0_40] : memref<9x128xf32, #tpu.memory_space<vmem>>, vector<1x128xf32>
    %63 = vector.shape_cast %62 : vector<1x128xf32> to vector<1x1x128xf32>
    %64 = vector.broadcast %63 : vector<1x1x128xf32> to vector<8x8x128xf32>
    %65 = arith.mulf %61, %64 : vector<8x8x128xf32>
    %66 = arith.addf %59, %65 : vector<8x8x128xf32>
    %c0_41 = arith.constant 0 : index
    %c1_42 = arith.constant 1 : index
    %c2_43 = arith.constant 2 : index
    %c0_44 = arith.constant 0 : index
    %67 = vector.load %arg9[%c0_41, %c1_42, %c2_43, %c0_44] : memref<1x10x16x128xf32, #tpu.memory_space<vmem>>, vector<1x8x8x128xf32>
    %68 = vector.shape_cast %67 : vector<1x8x8x128xf32> to vector<8x8x128xf32>
    %c5 = arith.constant 5 : index
    %c0_45 = arith.constant 0 : index
    %69 = vector.load %arg4[%c5, %c0_45] : memref<9x128xf32, #tpu.memory_space<vmem>>, vector<1x128xf32>
    %70 = vector.shape_cast %69 : vector<1x128xf32> to vector<1x1x128xf32>
    %71 = vector.broadcast %70 : vector<1x1x128xf32> to vector<8x8x128xf32>
    %72 = arith.mulf %68, %71 : vector<8x8x128xf32>
    %73 = arith.addf %66, %72 : vector<8x8x128xf32>
    %c0_46 = arith.constant 0 : index
    %c2_47 = arith.constant 2 : index
    %c0_48 = arith.constant 0 : index
    %c0_49 = arith.constant 0 : index
    %74 = vector.load %arg9[%c0_46, %c2_47, %c0_48, %c0_49] : memref<1x10x16x128xf32, #tpu.memory_space<vmem>>, vector<1x8x8x128xf32>
    %75 = vector.shape_cast %74 : vector<1x8x8x128xf32> to vector<8x8x128xf32>
    %c6 = arith.constant 6 : index
    %c0_50 = arith.constant 0 : index
    %76 = vector.load %arg4[%c6, %c0_50] : memref<9x128xf32, #tpu.memory_space<vmem>>, vector<1x128xf32>
    %77 = vector.shape_cast %76 : vector<1x128xf32> to vector<1x1x128xf32>
    %78 = vector.broadcast %77 : vector<1x1x128xf32> to vector<8x8x128xf32>
    %79 = arith.mulf %75, %78 : vector<8x8x128xf32>
    %80 = arith.addf %73, %79 : vector<8x8x128xf32>
    %c0_51 = arith.constant 0 : index
    %c2_52 = arith.constant 2 : index
    %c1_53 = arith.constant 1 : index
    %c0_54 = arith.constant 0 : index
    %81 = vector.load %arg9[%c0_51, %c2_52, %c1_53, %c0_54] : memref<1x10x16x128xf32, #tpu.memory_space<vmem>>, vector<1x8x8x128xf32>
    %82 = vector.shape_cast %81 : vector<1x8x8x128xf32> to vector<8x8x128xf32>
    %c7 = arith.constant 7 : index
    %c0_55 = arith.constant 0 : index
    %83 = vector.load %arg4[%c7, %c0_55] : memref<9x128xf32, #tpu.memory_space<vmem>>, vector<1x128xf32>
    %84 = vector.shape_cast %83 : vector<1x128xf32> to vector<1x1x128xf32>
    %85 = vector.broadcast %84 : vector<1x1x128xf32> to vector<8x8x128xf32>
    %86 = arith.mulf %82, %85 : vector<8x8x128xf32>
    %87 = arith.addf %80, %86 : vector<8x8x128xf32>
    %c0_56 = arith.constant 0 : index
    %c2_57 = arith.constant 2 : index
    %c2_58 = arith.constant 2 : index
    %c0_59 = arith.constant 0 : index
    %88 = vector.load %arg9[%c0_56, %c2_57, %c2_58, %c0_59] : memref<1x10x16x128xf32, #tpu.memory_space<vmem>>, vector<1x8x8x128xf32>
    %89 = vector.shape_cast %88 : vector<1x8x8x128xf32> to vector<8x8x128xf32>
    %c8 = arith.constant 8 : index
    %c0_60 = arith.constant 0 : index
    %90 = vector.load %arg4[%c8, %c0_60] : memref<9x128xf32, #tpu.memory_space<vmem>>, vector<1x128xf32>
    %91 = vector.shape_cast %90 : vector<1x128xf32> to vector<1x1x128xf32>
    %92 = vector.broadcast %91 : vector<1x1x128xf32> to vector<8x8x128xf32>
    %93 = arith.mulf %89, %92 : vector<8x8x128xf32>
    %94 = arith.addf %87, %93 : vector<8x8x128xf32>
    %c0_61 = arith.constant 0 : index
    %c0_62 = arith.constant 0 : index
    %95 = vector.load %arg5[%c0_61, %c0_62] : memref<1x128xf32, #tpu.memory_space<vmem>>, vector<1x128xf32>
    %96 = vector.shape_cast %95 : vector<1x128xf32> to vector<1x1x128xf32>
    %97 = vector.broadcast %96 : vector<1x1x128xf32> to vector<8x8x128xf32>
    %98 = arith.addf %94, %97 : vector<8x8x128xf32>
    %cst_63 = arith.constant 0.000000e+00 : f32
    %99 = vector.broadcast %cst_63 : f32 to vector<8x8x128xf32>
    %100 = arith.maximumf %98, %99 : vector<8x8x128xf32>
    %101 = vector.shape_cast %100 : vector<8x8x128xf32> to vector<64x128xf32>
    %c0_64 = arith.constant 0 : index
    %c0_65 = arith.constant 0 : index
    %102 = vector.load %arg6[%c0_64, %c0_65] : memref<128x128xf32, #tpu.memory_space<vmem>>, vector<128x128xf32>
    %cst_66 = arith.constant dense<0.000000e+00> : vector<64x128xf32>
    %103 = tpu.matmul %101, %102, %cst_66 {dimension_numbers = #tpu.dot_dimension_numbers<[1], [0], [0], [1], [0, 0, 1, 1], [], []>} : vector<64x128xf32>, vector<128x128xf32>, vector<64x128xf32> -> vector<64x128xf32>
    %c0_67 = arith.constant 0 : index
    %c0_68 = arith.constant 0 : index
    %104 = vector.load %arg7[%c0_67, %c0_68] : memref<1x128xf32, #tpu.memory_space<vmem>>, vector<1x128xf32>
    %105 = vector.broadcast %104 : vector<1x128xf32> to vector<64x128xf32>
    %106 = arith.addf %103, %105 : vector<64x128xf32>
    %c0_69 = arith.constant 0 : index
    %c1_70 = arith.constant 1 : index
    %c1_71 = arith.constant 1 : index
    %c0_72 = arith.constant 0 : index
    %107 = vector.load %arg1[%c0_69, %c1_70, %c1_71, %c0_72] : memref<1x10x16x128xf32, #tpu.memory_space<vmem>>, vector<1x8x8x128xf32>
    %108 = vector.shape_cast %107 : vector<1x8x8x128xf32> to vector<8x8x128xf32>
    %109 = vector.shape_cast %108 : vector<8x8x128xf32> to vector<64x128xf32>
    %110 = arith.addf %106, %109 : vector<64x128xf32>
    %cst_73 = arith.constant 0.000000e+00 : f32
    %111 = vector.broadcast %cst_73 : f32 to vector<64x128xf32>
    %112 = arith.maximumf %110, %111 : vector<64x128xf32>
    %c0_74 = arith.constant 0 : index
    %c0_75 = arith.constant 0 : index
    %c0_76 = arith.constant 0 : index
    %113 = vector.load %arg8[%c0_74, %c0_75, %c0_76] : memref<1x64x128xf32, #tpu.memory_space<vmem>>, vector<1x64x128xf32>
    %114 = vector.shape_cast %113 : vector<1x64x128xf32> to vector<64x128xf32>
    %115 = vector.shape_cast %112 : vector<64x128xf32> to vector<1x64x128xf32>
    tpu.vector_store %arg8[%c0_74, %c0_75, %c0_76], %115 {strides = array<i32>} : memref<1x64x128xf32, #tpu.memory_space<vmem>>, vector<1x64x128xf32>,
    return
  }
  func.func @transform_0(%arg0: i32) -> (i32, i32, i32, i32) {
    %c0_i32 = arith.constant 0 : i32
    %c0_i32_0 = arith.constant 0 : i32
    %c0_i32_1 = arith.constant 0 : i32
    %c0_i32_2 = arith.constant 0 : i32
    return %arg0, %c0_i32, %c0_i32_0, %c0_i32_1 : i32, i32, i32, i32
  }
  func.func @transform_1(%arg0: i32) -> (i32, i32) {
    %c0_i32 = arith.constant 0 : i32
    %c0_i32_0 = arith.constant 0 : i32
    %c0_i32_1 = arith.constant 0 : i32
    return %c0_i32, %c0_i32_0 : i32, i32
  }
  func.func @transform_2(%arg0: i32) -> (i32, i32) {
    %c0_i32 = arith.constant 0 : i32
    %c0_i32_0 = arith.constant 0 : i32
    %c0_i32_1 = arith.constant 0 : i32
    return %c0_i32, %c0_i32_0 : i32, i32
  }
  func.func @transform_3(%arg0: i32) -> (i32, i32) {
    %c0_i32 = arith.constant 0 : i32
    %c0_i32_0 = arith.constant 0 : i32
    %c0_i32_1 = arith.constant 0 : i32
    return %c0_i32, %c0_i32_0 : i32, i32
  }
  func.func @transform_4(%arg0: i32) -> (i32, i32) {
    %c0_i32 = arith.constant 0 : i32
    %c0_i32_0 = arith.constant 0 : i32
    %c0_i32_1 = arith.constant 0 : i32
    return %c0_i32, %c0_i32_0 : i32, i32
  }
  func.func @transform_5(%arg0: i32) -> (i32, i32) {
    %c0_i32 = arith.constant 0 : i32
    %c0_i32_0 = arith.constant 0 : i32
    %c0_i32_1 = arith.constant 0 : i32
    return %c0_i32, %c0_i32_0 : i32, i32
  }
  func.func @transform_6(%arg0: i32) -> (i32, i32) {
    %c0_i32 = arith.constant 0 : i32
    %c0_i32_0 = arith.constant 0 : i32
    %c0_i32_1 = arith.constant 0 : i32
    return %c0_i32, %c0_i32_0 : i32, i32
  }
  func.func @transform_7(%arg0: i32) -> (i32, i32, i32) {
    %c0_i32 = arith.constant 0 : i32
    %c0_i32_0 = arith.constant 0 : i32
    %c0_i32_1 = arith.constant 0 : i32
    return %arg0, %c0_i32, %c0_i32_0 : i32, i32, i32
  }
}

</mosaic_0001>

<llo_original>
// kernel: tpu_custom_call.1
$region0: #{tpu_custom_call.1}
  #allocation0 [shape = 'u32[]', space=smem, size = 0x4, offset = 0x4, fixed_abs, tag = 'smem constant byte address 0x4 - core index']
  #allocation1 [shape = 'u32[144,128]{1,0:T(1,128)}', space=vmem, size = 0x12000, scoped, tag = 'internal scratch']
  #allocation2 [shape = 'f32[1,10,16,128]{3,2,1,0:T(8,128)}', space=vmem, size = 0x14000, scoped, tag = 'scratch operand']
  %s0 = inlined_call_operand.hbm [shape: f32[2,10,16,128], index: 0, kind: input, shape index: {}]
  %s1 = inlined_call_operand.hbm [shape: f32[128,128], index: 1, kind: input, shape index: {}]
  %s2 = inlined_call_operand.vmem [shape: f32[1,128], index: 2, kind: input, shape index: {}]
  %s3 = inlined_call_operand.hbm [shape: f32[9,128], index: 3, kind: input, shape index: {}]
  %s4 = inlined_call_operand.vmem [shape: f32[1,128], index: 4, kind: input, shape index: {}]
  %s5 = inlined_call_operand.hbm [shape: f32[128,128], index: 5, kind: input, shape index: {}]
  %s6 = inlined_call_operand.vmem [shape: f32[1,128], index: 6, kind: input, shape index: {}]
  %s7 = inlined_call_operand.hbm [shape: f32[2,64,128], index: 7, kind: output, shape index: {}]
  %s8 = sld [smem:[#allocation0]]
  $region77: #{tpu_custom_call.1} parent=0
    _
  %s10 = ssub.s32 1, %s8
  %s11 = scalar_select 0, %s10, %s8
  $region1: #{tpu_custom_call.1} parent=0
    #allocation3 [shape = 'u8[163840]{0}', space=vmem, size = 0x28000, scoped, tag = 'input window, operand 0']
    #allocation4 [shape = 's32[2]{0}', space=sflag, size = 0x8, scoped, tag = 'scoped memory for tpu_custom_call.1']
    #allocation5 [shape = 's32[2]{0}', space=sflag, size = 0x8, scoped, tag = 'scoped memory for tpu_custom_call.1']
    #allocation6 [shape = 'u8[65536]{0}', space=vmem, size = 0x10000, scoped, tag = 'input window, operand 1, single buffered']
    #allocation7 [shape = 's32[1]{0}', space=sflag, size = 0x4, scoped, tag = 'scoped memory for tpu_custom_call.1']
    #allocation8 [shape = 'u8[8192]{0}', space=vmem, size = 0x2000, scoped, tag = 'input window, operand 3, single buffered']
    #allocation9 [shape = 'u8[65536]{0}', space=vmem, size = 0x10000, scoped, tag = 'input window, operand 5, single buffered']
    #allocation10 [shape = 's32[1]{0}', space=sflag, size = 0x4, scoped, tag = 'scoped memory for tpu_custom_call.1']
    #allocation11 [shape = 'u8[65536]{0}', space=vmem, size = 0x10000, scoped, tag = 'output window, operand 0']
    %12 = vsyncpa [#allocation4], 0
    %s13 = scalar_lea.sflag [#allocation4], 1
    %14 = vsyncpa %s13, 0
    %15 = vsyncpa [#allocation7], 0
    %16 = vsyncpa [#allocation10], 0
    %17 = vsyncpa [#allocation5], 0
    %s18 = scalar_lea.sflag [#allocation5], 1
    %19 = vsyncpa %s18, 0
    loop: start=0, step=1, limit=4
    $region2: #{tpu_custom_call.1} parent=1 // loop_pre_header
      _
    $region3: #{tpu_custom_call.1} parent=1 // loop_header
      %s21 = sphi 0, %s25
      %p22 = scmp.ge.s32.totalorder %s21, 4
      %s31 = sphi 0, %s33
      %s34 = sphi 0, %s31
      %s35 = sphi 0, %s34
      %s51 = sphi 0, %s35
      %s55 = sphi 0, %s55
      %s57 = sphi 0, %s55
      %s58 = sphi 0, %s57
      %s72 = sphi 0, %s58
      %s76 = sphi 0, %s76
      %s78 = sphi 0, %s76
      %s79 = sphi 0, %s78
      %s93 = sphi 0, %s79
      %s97 = sphi 0, %s97
      %s99 = sphi 0, %s97
      %s100 = sphi 0, %s99
      %s114 = sphi 0, %s100
      %s118 = sphi 0, %s118
      %s120 = sphi 0, %s118
      %s121 = sphi 0, %s120
      %s135 = sphi 0, %s121
      %s139 = sphi 0, %s139
      %s141 = sphi 0, %s139
      %s142 = sphi 0, %s141
      %s156 = sphi 0, %s142
      %s160 = sphi 0, %s160
      %s162 = sphi 0, %s160
      %s163 = sphi 0, %s162
      %s177 = sphi 0, %s163
      %s183 = sphi 0, %s185
      %s186 = sphi 0, %s183
      %s187 = sphi 0, %s186
      %s203 = sphi 0, %s187
    $region4: #{tpu_custom_call.1} parent=1 // loop_header_branch
      %24 = sbr.rel (%p22) target = $region8
    $region5: #{tpu_custom_call.1} parent=1 // loop_body
      %s26 = ssub.s32 %s21, 1
      %s27 = ssub.s32 %s21, 2
      %s28 = sadd.s32 %s21, 1
      %s29 = ssub.s32 %s21, %s28
      %p30 = scmp.eq.s32.totalorder %s29, 0
      %s32 = sadd.s32 %s31, 1
      %s33 = scalar_select %p30, %s31, %s32
      %p36 = pneg %p30
      %p37 = scmp.eq.s32.totalorder %s21, 1
      %p38 = por %p36, %p37
      %p39 = scmp.ne.s32.totalorder %s31, %s34
      %p40 = scmp.eq.s32.totalorder %s21, 0
      %p41 = por %p39, %p40
      %p42 = scmp.ne.s32.totalorder %s31, %s34
      %p43 = scmp.eq.s32.totalorder %s26, 1
      %p44 = por %p42, %p43
      %p45 = scmp.ne.s32.totalorder %s34, %s35
      %p46 = scmp.eq.s32.totalorder %s26, 0
      %p47 = por %p45, %p46
      %p48 = scmp.ne.s32.totalorder %s34, %s35
      %p49 = scmp.eq.s32.totalorder %s27, 1
      %p50 = por %p48, %p49
      %p52 = scmp.ne.s32.totalorder %s35, %s51
      %p53 = scmp.eq.s32.totalorder %s27, 0
      %p54 = por %p52, %p53
      %s56 = sadd.s32 %s55, 1
      %p59 = scmp.eq.s32.totalorder %s21, 1
      %p60 = scmp.ne.s32.totalorder %s55, %s57
      %p61 = scmp.eq.s32.totalorder %s21, 0
      %p62 = por %p60, %p61
      %p63 = scmp.ne.s32.totalorder %s55, %s57
      %p64 = scmp.eq.s32.totalorder %s26, 1
      %p65 = por %p63, %p64
      %p66 = scmp.ne.s32.totalorder %s57, %s58
      %p67 = scmp.eq.s32.totalorder %s26, 0
      %p68 = por %p66, %p67
      %p69 = scmp.ne.s32.totalorder %s57, %s58
      %p70 = scmp.eq.s32.totalorder %s27, 1
      %p71 = por %p69, %p70
      %p73 = scmp.ne.s32.totalorder %s58, %s72
      %p74 = scmp.eq.s32.totalorder %s27, 0
      %p75 = por %p73, %p74
      %s77 = sadd.s32 %s76, 1
      %p80 = scmp.eq.s32.totalorder %s21, 1
      %p81 = scmp.ne.s32.totalorder %s76, %s78
      %p82 = scmp.eq.s32.totalorder %s21, 0
      %p83 = por %p81, %p82
      %p84 = scmp.ne.s32.totalorder %s76, %s78
      %p85 = scmp.eq.s32.totalorder %s26, 1
      %p86 = por %p84, %p85
      %p87 = scmp.ne.s32.totalorder %s78, %s79
      %p88 = scmp.eq.s32.totalorder %s26, 0
      %p89 = por %p87, %p88
      %p90 = scmp.ne.s32.totalorder %s78, %s79
      %p91 = scmp.eq.s32.totalorder %s27, 1
      %p92 = por %p90, %p91
      %p94 = scmp.ne.s32.totalorder %s79, %s93
      %p95 = scmp.eq.s32.totalorder %s27, 0
      %p96 = por %p94, %p95
      %s98 = sadd.s32 %s97, 1
      %p101 = scmp.eq.s32.totalorder %s21, 1
      %p102 = scmp.ne.s32.totalorder %s97, %s99
      %p103 = scmp.eq.s32.totalorder %s21, 0
      %p104 = por %p102, %p103
      %p105 = scmp.ne.s32.totalorder %s97, %s99
      %p106 = scmp.eq.s32.totalorder %s26, 1
      %p107 = por %p105, %p106
      %p108 = scmp.ne.s32.totalorder %s99, %s100
      %p109 = scmp.eq.s32.totalorder %s26, 0
      %p110 = por %p108, %p109
      %p111 = scmp.ne.s32.totalorder %s99, %s100
      %p112 = scmp.eq.s32.totalorder %s27, 1
      %p113 = por %p111, %p112
      %p115 = scmp.ne.s32.totalorder %s100, %s114
      %p116 = scmp.eq.s32.totalorder %s27, 0
      %p117 = por %p115, %p116
      %s119 = sadd.s32 %s118, 1
      %p122 = scmp.eq.s32.totalorder %s21, 1
      %p123 = scmp.ne.s32.totalorder %s118, %s120
      %p124 = scmp.eq.s32.totalorder %s21, 0
      %p125 = por %p123, %p124
      %p126 = scmp.ne.s32.totalorder %s118, %s120
      %p127 = scmp.eq.s32.totalorder %s26, 1
      %p128 = por %p126, %p127
      %p129 = scmp.ne.s32.totalorder %s120, %s121
      %p130 = scmp.eq.s32.totalorder %s26, 0
      %p131 = por %p129, %p130
      %p132 = scmp.ne.s32.totalorder %s120, %s121
      %p133 = scmp.eq.s32.totalorder %s27, 1
      %p134 = por %p132, %p133
      %p136 = scmp.ne.s32.totalorder %s121, %s135
      %p137 = scmp.eq.s32.totalorder %s27, 0
      %p138 = por %p136, %p137
      %s140 = sadd.s32 %s139, 1
      %p143 = scmp.eq.s32.totalorder %s21, 1
      %p144 = scmp.ne.s32.totalorder %s139, %s141
      %p145 = scmp.eq.s32.totalorder %s21, 0
      %p146 = por %p144, %p145
      %p147 = scmp.ne.s32.totalorder %s139, %s141
      %p148 = scmp.eq.s32.totalorder %s26, 1
      %p149 = por %p147, %p148
      %p150 = scmp.ne.s32.totalorder %s141, %s142
      %p151 = scmp.eq.s32.totalorder %s26, 0
      %p152 = por %p150, %p151
      %p153 = scmp.ne.s32.totalorder %s141, %s142
      %p154 = scmp.eq.s32.totalorder %s27, 1
      %p155 = por %p153, %p154
      %p157 = scmp.ne.s32.totalorder %s142, %s156
      %p158 = scmp.eq.s32.totalorder %s27, 0
      %p159 = por %p157, %p158
      %s161 = sadd.s32 %s160, 1
      %p164 = scmp.eq.s32.totalorder %s21, 1
      %p165 = scmp.ne.s32.totalorder %s160, %s162
      %p166 = scmp.eq.s32.totalorder %s21, 0
      %p167 = por %p165, %p166
      %p168 = scmp.ne.s32.totalorder %s160, %s162
      %p169 = scmp.eq.s32.totalorder %s26, 1
      %p170 = por %p168, %p169
      %p171 = scmp.ne.s32.totalorder %s162, %s163
      %p172 = scmp.eq.s32.totalorder %s26, 0
      %p173 = por %p171, %p172
      %p174 = scmp.ne.s32.totalorder %s162, %s163
      %p175 = scmp.eq.s32.totalorder %s27, 1
      %p176 = por %p174, %p175
      %p178 = scmp.ne.s32.totalorder %s163, %s177
      %p179 = scmp.eq.s32.totalorder %s27, 0
      %p180 = por %p178, %p179
      %s181 = ssub.s32 %s21, %s28
      %p182 = scmp.eq.s32.totalorder %s181, 0
      %s184 = sadd.s32 %s183, 1
      %s185 = scalar_select %p182, %s183, %s184
      %p188 = pneg %p182
      %p189 = scmp.eq.s32.totalorder %s21, 1
      %p190 = por %p188, %p189
      %p191 = scmp.ne.s32.totalorder %s183, %s186
      %p192 = scmp.eq.s32.totalorder %s21, 0
      %p193 = por %p191, %p192
      %p194 = scmp.ne.s32.totalorder %s183, %s186
      %p195 = scmp.eq.s32.totalorder %s26, 1
      %p196 = por %p194, %p195
      %p197 = scmp.ne.s32.totalorder %s186, %s187
      %p198 = scmp.eq.s32.totalorder %s26, 0
      %p199 = por %p197, %p198
      %p200 = scmp.ne.s32.totalorder %s186, %s187
      %p201 = scmp.eq.s32.totalorder %s27, 1
      %p202 = por %p200, %p201
      %p204 = scmp.ne.s32.totalorder %s187, %s203
      %p205 = scmp.eq.s32.totalorder %s27, 0
      %p206 = por %p204, %p205
      %p207 = scmp.le.s32.totalorder 1, %s21
      %p208 = scmp.lt.s32.totalorder %s21, 3
      %p209 = pnand %p207, %p208
      %p210 = pneg %p209
      // Predicated region
      $region9: #{tpu_custom_call.1} parent=5 // pred_check
        _
      $region10: #{tpu_custom_call.1} parent=5 // pred_check_branch
        %212 = sbr.rel (%p209) target = $region12
      $region11: #{tpu_custom_call.1} parent=5 // pred_region
        %s213 = ssub.s32 %s21, 1
        // Predicated region
        $region13: #{tpu_custom_call.1} parent=11 // pred_check
          %p214 = pneg %p68
        $region14: #{tpu_custom_call.1} parent=11 // pred_check_branch
          %216 = sbr.rel (%p214) target = $region16
        $region15: #{tpu_custom_call.1} parent=11 // pred_region
          %s218 = ssub.s32 2048, 2048
          %219 = vsyncadd [#allocation7], %s218
          %s220 = sshll.u32 [#allocation6], 4
          %s221 = int_to_ptr.vmem [resolvable:$true] %s220
          %226 = dma.hbm_to_vmem [thread:$0]  %s1, 2048, %s221, [#allocation7], 128, 128, 8
        $region16: #{tpu_custom_call.1} parent=11 // pred_fallthru
          _
        // Predicated region
        $region17: #{tpu_custom_call.1} parent=11 // pred_check
          %p227 = pneg %p89
        $region18: #{tpu_custom_call.1} parent=11 // pred_check_branch
          %229 = sbr.rel (%p227) target = $region20
        $region19: #{tpu_custom_call.1} parent=11 // pred_region
          _
        $region20: #{tpu_custom_call.1} parent=11 // pred_fallthru
          _
        // Predicated region
        $region21: #{tpu_custom_call.1} parent=11 // pred_check
          %p230 = pneg %p110
        $region22: #{tpu_custom_call.1} parent=11 // pred_check_branch
          %232 = sbr.rel (%p230) target = $region24
        $region23: #{tpu_custom_call.1} parent=11 // pred_region
          %s234 = ssub.s32 256, 256
          %235 = vsyncadd [#allocation7], %s234
          %s236 = sshll.u32 [#allocation8], 4
          %s237 = int_to_ptr.vmem [resolvable:$true] %s236
          %242 = dma.hbm_to_vmem [thread:$0]  %s3, 256, %s237, [#allocation7], 128, 128, 8
        $region24: #{tpu_custom_call.1} parent=11 // pred_fallthru
          _
        // Predicated region
        $region25: #{tpu_custom_call.1} parent=11 // pred_check
          %p243 = pneg %p131
        $region26: #{tpu_custom_call.1} parent=11 // pred_check_branch
          %245 = sbr.rel (%p243) target = $region28
        $region27: #{tpu_custom_call.1} parent=11 // pred_region
          _
        $region28: #{tpu_custom_call.1} parent=11 // pred_fallthru
          _
        // Predicated region
        $region29: #{tpu_custom_call.1} parent=11 // pred_check
          %p246 = pneg %p152
        $region30: #{tpu_custom_call.1} parent=11 // pred_check_branch
          %248 = sbr.rel (%p246) target = $region32
        $region31: #{tpu_custom_call.1} parent=11 // pred_region
          %s250 = ssub.s32 2048, 2048
          %251 = vsyncadd [#allocation10], %s250
          %s252 = sshll.u32 [#allocation9], 4
          %s253 = int_to_ptr.vmem [resolvable:$true] %s252
          %258 = dma.hbm_to_vmem [thread:$0]  %s5, 2048, %s253, [#allocation10], 128, 128, 8
        $region32: #{tpu_custom_call.1} parent=11 // pred_fallthru
          _
        // Predicated region
        $region33: #{tpu_custom_call.1} parent=11 // pred_check
          %p259 = pneg %p173
        $region34: #{tpu_custom_call.1} parent=11 // pred_check_branch
          %261 = sbr.rel (%p259) target = $region36
        $region35: #{tpu_custom_call.1} parent=11 // pred_region
          _
        $region36: #{tpu_custom_call.1} parent=11 // pred_fallthru
          _
      $region12: #{tpu_custom_call.1} parent=5 // pred_fallthru
        _
      %p262 = scmp.lt.s32.totalorder %s21, 2
      // Predicated region
      $region37: #{tpu_custom_call.1} parent=5 // pred_check
        %p263 = pneg %p262
      $region38: #{tpu_custom_call.1} parent=5 // pred_check_branch
        %265 = sbr.rel (%p263) target = $region40
      $region39: #{tpu_custom_call.1} parent=5 // pred_region
        // Predicated region
        $region41: #{tpu_custom_call.1} parent=39 // pred_check
          %p266 = pneg %p41
        $region42: #{tpu_custom_call.1} parent=39 // pred_check_branch
          %268 = sbr.rel (%p266) target = $region44
        $region43: #{tpu_custom_call.1} parent=39 // pred_region
          %s269 = sand.u32 %s31, 1
          %s270 = scalar_lea.sflag [#allocation4], %s269
          %s271 = sand.u32 %s31, 1
          %s272 = smul.addr %s271, 160
          %s273 = scalar_lea.vmem [#allocation3], %s272
          %s275 = ssub.s32 2560, 2560
          %276 = vsyncadd %s270, %s275
          %s277 = smul.addr %s21, 20
          %s278 = smul.addr %s277, 128
          %s279 = scalar_lea.hbm %s0, %s278
          %s280 = sshll.u32 %s273, 4
          %s281 = int_to_ptr.vmem [resolvable:$true] %s280
          %286 = dma.hbm_to_vmem [thread:$0]  %s279, 2560, %s281, %s270, 128, 128, 8
        $region44: #{tpu_custom_call.1} parent=39 // pred_fallthru
          _
      $region40: #{tpu_custom_call.1} parent=5 // pred_fallthru
        _
      %p287 = scmp.le.s32.totalorder 1, %s21
      %p288 = scmp.lt.s32.totalorder %s21, 3
      %p289 = pnand %p287, %p288
      %p290 = pneg %p289
      // Predicated region
      $region45: #{tpu_custom_call.1} parent=5 // pred_check
        _
      $region46: #{tpu_custom_call.1} parent=5 // pred_check_branch
        %292 = sbr.rel (%p289) target = $region48
      $region47: #{tpu_custom_call.1} parent=5 // pred_region
        %s293 = ssub.s32 %s21, 1
        %s294 = sand.u32 %s34, 1
        %s295 = scalar_lea.sflag [#allocation4], %s294
        %s296 = sand.u32 %s34, 1
        %s297 = smul.addr %s296, 160
        %s298 = scalar_lea.vmem [#allocation3], %s297
        // Predicated region
        $region49: #{tpu_custom_call.1} parent=47 // pred_check
          %p299 = pneg %p47
        $region50: #{tpu_custom_call.1} parent=47 // pred_check_branch
          %301 = sbr.rel (%p299) target = $region52
        $region51: #{tpu_custom_call.1} parent=47 // pred_region
          %302 = dma.done %s295, 2560
        $region52: #{tpu_custom_call.1} parent=47 // pred_fallthru
          _
        // Predicated region
        $region53: #{tpu_custom_call.1} parent=47 // pred_check
          %p303 = pneg %p68
        $region54: #{tpu_custom_call.1} parent=47 // pred_check_branch
          %305 = sbr.rel (%p303) target = $region56
        $region55: #{tpu_custom_call.1} parent=47 // pred_region
          %306 = dma.done [#allocation7], 2048
        $region56: #{tpu_custom_call.1} parent=47 // pred_fallthru
          _
        // Predicated region
        $region57: #{tpu_custom_call.1} parent=47 // pred_check
          %p307 = pneg %p110
        $region58: #{tpu_custom_call.1} parent=47 // pred_check_branch
          %309 = sbr.rel (%p307) target = $region60
        $region59: #{tpu_custom_call.1} parent=47 // pred_region
          %310 = dma.done [#allocation7], 256
        $region60: #{tpu_custom_call.1} parent=47 // pred_fallthru
          _
        // Predicated region
        $region61: #{tpu_custom_call.1} parent=47 // pred_check
          %p311 = pneg %p152
        $region62: #{tpu_custom_call.1} parent=47 // pred_check_branch
          %313 = sbr.rel (%p311) target = $region64
        $region63: #{tpu_custom_call.1} parent=47 // pred_region
          %314 = dma.done [#allocation10], 2048
        $region64: #{tpu_custom_call.1} parent=47 // pred_fallthru
          _
        %s315 = sand.u32 %s34, 1
        %s316 = scalar_lea.sflag [#allocation4], %s315
        %s317 = sand.u32 %s34, 1
        %s318 = smul.addr %s317, 160
        %s319 = scalar_lea.vmem [#allocation3], %s318
        %p320 = pneg %p47
        %p321 = pneg %p44
        %p322 = pneg %p68
        %p323 = pneg %p65
        %p324 = pneg %p89
        %p325 = pneg %p86
        %p326 = pneg %p110
        %p327 = pneg %p107
        %p328 = pneg %p131
        %p329 = pneg %p128
        %p330 = pneg %p152
        %p331 = pneg %p149
        %p332 = pneg %p173
        %p333 = pneg %p170
        %p334 = pneg %p199
        %p335 = pneg %p196
        %s336 = sand.u32 %s186, 1
        %s337 = scalar_lea.sflag [#allocation5], %s336
        %s338 = sand.u32 %s186, 1
        %s339 = smul.addr %s338, 64
        %s340 = scalar_lea.vmem [#allocation11], %s339
        %v341 = vld [vmem:[#allocation6] sm:$0xff]
        %v342 = vld [vmem:[#allocation6 + $0x8] sm:$0xff]
        %v343 = vld [vmem:[#allocation6 + $0x10] sm:$0xff]
        %v344 = vld [vmem:[#allocation6 + $0x18] sm:$0xff]
        %v345 = vld [vmem:[#allocation6 + $0x20] sm:$0xff]
        %v346 = vld [vmem:[#allocation6 + $0x28] sm:$0xff]
        %v347 = vld [vmem:[#allocation6 + $0x30] sm:$0xff]
        %v348 = vld [vmem:[#allocation6 + $0x38] sm:$0xff]
        %v349 = vld [vmem:[#allocation6 + $0x40] sm:$0xff]
        %v350 = vld [vmem:[#allocation6 + $0x48] sm:$0xff]
        %v351 = vld [vmem:[#allocation6 + $0x50] sm:$0xff]
        %v352 = vld [vmem:[#allocation6 + $0x58] sm:$0xff]
        %v353 = vld [vmem:[#allocation6 + $0x60] sm:$0xff]
        %v354 = vld [vmem:[#allocation6 + $0x68] sm:$0xff]
        %v355 = vld [vmem:[#allocation6 + $0x70] sm:$0xff]
        %v356 = vld [vmem:[#allocation6 + $0x78] sm:$0xff]
        %v357 = vld [vmem:[%s2] sm:$0x1]
        %v358 = vld [vmem:[%s298] sm:$0xff]
        %v359 = vld [vmem:[%s298 + $0x8] sm:$0xff]
        %v360 = vld [vmem:[%s298 + $0x10] sm:$0xff]
        %v361 = vld [vmem:[%s298 + $0x18] sm:$0xff]
        %v362 = vld [vmem:[%s298 + $0x20] sm:$0xff]
        %v363 = vld [vmem:[%s298 + $0x28] sm:$0xff]
        %v364 = vld [vmem:[%s298 + $0x30] sm:$0xff]
        %v365 = vld [vmem:[%s298 + $0x38] sm:$0xff]
        %v366 = vld [vmem:[%s298 + $0x40] sm:$0xff]
        %v367 = vld [vmem:[%s298 + $0x48] sm:$0xff]
        %v368 = vld [vmem:[%s298 + $0x50] sm:$0xff]
        %v369 = vld [vmem:[%s298 + $0x58] sm:$0xff]
        %v370 = vld [vmem:[%s298 + $0x60] sm:$0xff]
        %v371 = vld [vmem:[%s298 + $0x68] sm:$0xff]
        %v372 = vld [vmem:[%s298 + $0x70] sm:$0xff]
        %v373 = vld [vmem:[%s298 + $0x78] sm:$0xff]
        %v374 = vld [vmem:[%s298 + $0x80] sm:$0xff]
        %v375 = vld [vmem:[%s298 + $0x88] sm:$0xff]
        %v376 = vld [vmem:[%s298 + $0x90] sm:$0xff]
        %v377 = vld [vmem:[%s298 + $0x98] sm:$0xff]
        %v379 = vlaneseq
        %v380 = vshrl.u32 %v379, 7
        %v381 = vsub.s32 0, %v380
        %v382 = vrot.slane %v357, %v381
        %384 = vmatprep.subr.mxu0 0.0
        %385 = vmatpush1.msra.mxu0 %v356
        %386 = vmatprep.subr.mxu0 0.0
        %387 = vmatpush1.msra.mxu0 %v355
        %388 = vmatprep.subr.mxu0 0.0
        %389 = vmatpush1.msra.mxu0 %v354
        %390 = vmatprep.subr.mxu0 0.0
        %391 = vmatpush1.msra.mxu0 %v353
        %392 = vmatprep.subr.mxu0 0.0
        %393 = vmatpush1.msra.mxu0 %v352
        %394 = vmatprep.subr.mxu0 0.0
        %395 = vmatpush1.msra.mxu0 %v351
        %396 = vmatprep.subr.mxu0 0.0
        %397 = vmatpush1.msra.mxu0 %v350
        %398 = vmatprep.subr.mxu0 0.0
        %399 = vmatpush1.msra.mxu0 %v349
        %400 = vmatprep.subr.mxu0 0.0
        %401 = vmatpush1.msra.mxu0 %v348
        %402 = vmatprep.subr.mxu0 0.0
        %403 = vmatpush1.msra.mxu0 %v347
        %404 = vmatprep.subr.mxu0 0.0
        %405 = vmatpush1.msra.mxu0 %v346
        %406 = vmatprep.subr.mxu0 0.0
        %407 = vmatpush1.msra.mxu0 %v345
        %408 = vmatprep.subr.mxu0 0.0
        %409 = vmatpush1.msra.mxu0 %v344
        %410 = vmatprep.subr.mxu0 0.0
        %411 = vmatpush1.msra.mxu0 %v343
        %412 = vmatprep.subr.mxu0 0.0
        %413 = vmatpush1.msra.mxu0 %v342
        %414 = vmatprep.subr.mxu0 0.0
        %415 = vmatpush1.msra.mxu0 %v341
        %416 = vmatprep.subr.mxu0 0.0
        %417 = vmatpush2.msra.mxu0 0.0
        %418 = vmatprep.subr.mxu0 0.0
        %419 = vmatpush2.msra.mxu0 0.0
        %420 = vmatprep.subr.mxu0 0.0
        %421 = vmatpush2.msra.mxu0 0.0
        %422 = vmatprep.subr.mxu0 0.0
        %423 = vmatpush2.msra.mxu0 0.0
        %424 = vmatprep.subr.mxu0 0.0
        %425 = vmatpush2.msra.mxu0 0.0
        %426 = vmatprep.subr.mxu0 0.0
        %427 = vmatpush2.msra.mxu0 0.0
        %428 = vmatprep.subr.mxu0 0.0
        %429 = vmatpush2.msra.mxu0 0.0
        %430 = vmatprep.subr.mxu0 0.0
        %431 = vmatpush2.msra.mxu0 0.0
        %432 = vmatprep.subr.mxu0 0.0
        %433 = vmatpush2.msra.mxu0 0.0
        %434 = vmatprep.subr.mxu0 0.0
        %435 = vmatpush2.msra.mxu0 0.0
        %436 = vmatprep.subr.mxu0 0.0
        %437 = vmatpush2.msra.mxu0 0.0
        %438 = vmatprep.subr.mxu0 0.0
        %439 = vmatpush2.msra.mxu0 0.0
        %440 = vmatprep.subr.mxu0 0.0
        %441 = vmatpush2.msra.mxu0 0.0
        %442 = vmatprep.subr.mxu0 0.0
        %443 = vmatpush2.msra.mxu0 0.0
        %444 = vmatprep.subr.mxu0 0.0
        %445 = vmatpush2.msra.mxu0 0.0
        %446 = vmatprep.subr.mxu0 0.0
        %447 = vmatpush2.msra.mxu0 0.0
        %448 = vmatprep.mubr.f32.mxu0 0.0
        %449 = vmatmul.mubr.f32.gmra.mxu0 %v358
        %v450 = vpop.f32.mrf.mxu0
        %v451 = vadd.f32 %v382, %v450
        %v452 = vpop.f32.mrf.mxu0
        %453 = vmatprep.mubr.f32.mxu0 0.0
        %454 = vmatmul.mubr.f32.gmra.mxu0 %v359
        %v455 = vpop.f32.mrf.mxu0
        %v456 = vadd.f32 %v382, %v455
        %v457 = vpop.f32.mrf.mxu0
        %458 = vmatprep.mubr.f32.mxu0 0.0
        %459 = vmatmul.mubr.f32.gmra.mxu0 %v360
        %v460 = vpop.f32.mrf.mxu0
        %v461 = vadd.f32 %v382, %v460
        %v462 = vpop.f32.mrf.mxu0
        %463 = vmatprep.mubr.f32.mxu0 0.0
        %464 = vmatmul.mubr.f32.gmra.mxu0 %v361
        %v465 = vpop.f32.mrf.mxu0
        %v466 = vadd.f32 %v382, %v465
        %v467 = vpop.f32.mrf.mxu0
        %468 = vmatprep.mubr.f32.mxu0 0.0
        %469 = vmatmul.mubr.f32.gmra.mxu0 %v362
        %v470 = vpop.f32.mrf.mxu0
        %v471 = vadd.f32 %v382, %v470
        %v472 = vpop.f32.mrf.mxu0
        %473 = vmatprep.mubr.f32.mxu0 0.0
        %474 = vmatmul.mubr.f32.gmra.mxu0 %v363
        %v475 = vpop.f32.mrf.mxu0
        %v476 = vadd.f32 %v382, %v475
        %v477 = vpop.f32.mrf.mxu0
        %478 = vmatprep.mubr.f32.mxu0 0.0
        %479 = vmatmul.mubr.f32.gmra.mxu0 %v364
        %v480 = vpop.f32.mrf.mxu0
        %v481 = vadd.f32 %v382, %v480
        %v482 = vpop.f32.mrf.mxu0
        %483 = vmatprep.mubr.f32.mxu0 0.0
        %484 = vmatmul.mubr.f32.gmra.mxu0 %v365
        %v485 = vpop.f32.mrf.mxu0
        %v486 = vadd.f32 %v382, %v485
        %v487 = vpop.f32.mrf.mxu0
        %488 = vmatprep.mubr.f32.mxu0 0.0
        %489 = vmatmul.mubr.f32.gmra.mxu0 %v366
        %v490 = vpop.f32.mrf.mxu0
        %v491 = vadd.f32 %v382, %v490
        %v492 = vpop.f32.mrf.mxu0
        %493 = vmatprep.mubr.f32.mxu0 0.0
        %494 = vmatmul.mubr.f32.gmra.mxu0 %v367
        %v495 = vpop.f32.mrf.mxu0
        %v496 = vadd.f32 %v382, %v495
        %v497 = vpop.f32.mrf.mxu0
        %498 = vmatprep.mubr.f32.mxu0 0.0
        %499 = vmatmul.mubr.f32.gmra.mxu0 %v368
        %v500 = vpop.f32.mrf.mxu0
        %v501 = vadd.f32 %v382, %v500
        %v502 = vpop.f32.mrf.mxu0
        %503 = vmatprep.mubr.f32.mxu0 0.0
        %504 = vmatmul.mubr.f32.gmra.mxu0 %v369
        %v505 = vpop.f32.mrf.mxu0
        %v506 = vadd.f32 %v382, %v505
        %v507 = vpop.f32.mrf.mxu0
        %508 = vmatprep.mubr.f32.mxu0 0.0
        %509 = vmatmul.mubr.f32.gmra.mxu0 %v370
        %v510 = vpop.f32.mrf.mxu0
        %v511 = vadd.f32 %v382, %v510
        %v512 = vpop.f32.mrf.mxu0
        %513 = vmatprep.mubr.f32.mxu0 0.0
        %514 = vmatmul.mubr.f32.gmra.mxu0 %v371
        %v515 = vpop.f32.mrf.mxu0
        %v516 = vadd.f32 %v382, %v515
        %v517 = vpop.f32.mrf.mxu0
        %518 = vmatprep.mubr.f32.mxu0 0.0
        %519 = vmatmul.mubr.f32.gmra.mxu0 %v372
        %v520 = vpop.f32.mrf.mxu0
        %v521 = vadd.f32 %v382, %v520
        %v522 = vpop.f32.mrf.mxu0
        %523 = vmatprep.mubr.f32.mxu0 0.0
        %524 = vmatmul.mubr.f32.gmra.mxu0 %v373
        %v525 = vpop.f32.mrf.mxu0
        %v526 = vadd.f32 %v382, %v525
        %v527 = vpop.f32.mrf.mxu0
        %528 = vmatprep.mubr.f32.mxu0 0.0
        %529 = vmatmul.mubr.f32.gmra.mxu0 %v374
        %v530 = vpop.f32.mrf.mxu0
        %v531 = vadd.f32 %v382, %v530
        %v532 = vpop.f32.mrf.mxu0
        %533 = vmatprep.mubr.f32.mxu0 0.0
        %534 = vmatmul.mubr.f32.gmra.mxu0 %v375
        %v535 = vpop.f32.mrf.mxu0
        %v536 = vadd.f32 %v382, %v535
        %v537 = vpop.f32.mrf.mxu0
        %538 = vmatprep.mubr.f32.mxu0 0.0
        %539 = vmatmul.mubr.f32.gmra.mxu0 %v376
        %v540 = vpop.f32.mrf.mxu0
        %v541 = vadd.f32 %v382, %v540
        %v542 = vpop.f32.mrf.mxu0
        %543 = vmatprep.mubr.f32.mxu0 0.0
        %544 = vmatmul.mubr.f32.gmra.mxu0 %v377
        %v545 = vpop.f32.mrf.mxu0
        %v546 = vadd.f32 %v382, %v545
        %v547 = vpop.f32.mrf.mxu0
        %548 = vdwg.mxu0
        %v549 = vmax.f32 %v451, 0.0
        %v550 = vmax.f32 %v456, 0.0
        %v551 = vmax.f32 %v461, 0.0
        %v552 = vmax.f32 %v466, 0.0
        %v553 = vmax.f32 %v471, 0.0
        %v554 = vmax.f32 %v476, 0.0
        %v555 = vmax.f32 %v481, 0.0
        %v556 = vmax.f32 %v486, 0.0
        %v557 = vmax.f32 %v491, 0.0
        %v558 = vmax.f32 %v496, 0.0
        %v559 = vmax.f32 %v501, 0.0
        %v560 = vmax.f32 %v506, 0.0
        %v561 = vmax.f32 %v511, 0.0
        %v562 = vmax.f32 %v516, 0.0
        %v563 = vmax.f32 %v521, 0.0
        %v564 = vmax.f32 %v526, 0.0
        %v565 = vmax.f32 %v531, 0.0
        %v566 = vmax.f32 %v536, 0.0
        %v567 = vmax.f32 %v541, 0.0
        %v568 = vmax.f32 %v546, 0.0
        %v569 = vlaneseq
        %v570 = vshrl.u32 %v569, 7
        %v571 = vadd.s32 %v570, 8
        %vm572 = vcmp.ge.s32.totalorder %v570, 1
        %vm573 = vcmp.ge.s32.totalorder %v571, 1
        %vm574 = vmand 0, %vm572
        %vm575 = vmand 0, %vm573
        %vm576 = vmand 1, %vm572
        %vm577 = vmand 1, %vm573
        %vm578 = vcmp.lt.s32.totalorder %v570, 9
        %vm579 = vcmp.lt.s32.totalorder %v571, 9
        %vm580 = vmand %vm574, %vm578
        %vm581 = vmand %vm575, %vm579
        %vm582 = vmand %vm576, %vm578
        %vm583 = vmand %vm577, %vm579
        %v584 = vsel %vm580, 1, 0
        %v585 = vsel %vm581, 1, 0
        %v586 = vsel %vm582, 1, 0
        %v587 = vsel %vm583, 1, 0
        %v588 = vcvt.s32.f32 %v584
        %v589 = vcvt.s32.f32 %v585
        %v590 = vcvt.s32.f32 %v586
        %v591 = vcvt.s32.f32 %v587
        %v592 = vmul.f32 %v549, %v588
        %v593 = vmul.f32 %v550, %v589
        %v594 = vmul.f32 %v551, %v590
        %v595 = vmul.f32 %v552, %v591
        %v596 = vmul.f32 %v553, %v590
        %v597 = vmul.f32 %v554, %v591
        %v598 = vmul.f32 %v555, %v590
        %v599 = vmul.f32 %v556, %v591
        %v600 = vmul.f32 %v557, %v590
        %v601 = vmul.f32 %v558, %v591
        %v602 = vmul.f32 %v559, %v590
        %v603 = vmul.f32 %v560, %v591
        %v604 = vmul.f32 %v561, %v590
        %v605 = vmul.f32 %v562, %v591
        %v606 = vmul.f32 %v563, %v590
        %v607 = vmul.f32 %v564, %v591
        %v608 = vmul.f32 %v565, %v590
        %v609 = vmul.f32 %v566, %v591
        %v610 = vmul.f32 %v567, %v588
        %v611 = vmul.f32 %v568, %v589
        %612 = vst [vmem:[#allocation2] sm:$0xff] %v592
        %613 = vst [vmem:[#allocation2 + $0x8] sm:$0xff] %v593
        %614 = vst [vmem:[#allocation2 + $0x10] sm:$0xff] %v594
        %615 = vst [vmem:[#allocation2 + $0x18] sm:$0xff] %v595
        %616 = vst [vmem:[#allocation2 + $0x20] sm:$0xff] %v596
        %617 = vst [vmem:[#allocation2 + $0x28] sm:$0xff] %v597
        %618 = vst [vmem:[#allocation2 + $0x30] sm:$0xff] %v598
        %619 = vst [vmem:[#allocation2 + $0x38] sm:$0xff] %v599
        %620 = vst [vmem:[#allocation2 + $0x40] sm:$0xff] %v600
        %621 = vst [vmem:[#allocation2 + $0x48] sm:$0xff] %v601
        %622 = vst [vmem:[#allocation2 + $0x50] sm:$0xff] %v602
        %623 = vst [vmem:[#allocation2 + $0x58] sm:$0xff] %v603
        %624 = vst [vmem:[#allocation2 + $0x60] sm:$0xff] %v604
        %625 = vst [vmem:[#allocation2 + $0x68] sm:$0xff] %v605
        %626 = vst [vmem:[#allocation2 + $0x70] sm:$0xff] %v606
        %627 = vst [vmem:[#allocation2 + $0x78] sm:$0xff] %v607
        %628 = vst [vmem:[#allocation2 + $0x80] sm:$0xff] %v608
        %629 = vst [vmem:[#allocation2 + $0x88] sm:$0xff] %v609
        %630 = vst [vmem:[#allocation2 + $0x90] sm:$0xff] %v610
        %631 = vst [vmem:[#allocation2 + $0x98] sm:$0xff] %v611
        %v632 = vld [vmem:[#allocation2] sm:$0xff]
        %v633 = vld [vmem:[#allocation2 + $0x10] sm:$0xff]
        %v634 = vld [vmem:[#allocation2 + $0x20] sm:$0xff]
        %v635 = vld [vmem:[#allocation2 + $0x30] sm:$0xff]
        %v636 = vld [vmem:[#allocation2 + $0x40] sm:$0xff]
        %v637 = vld [vmem:[#allocation2 + $0x50] sm:$0xff]
        %v638 = vld [vmem:[#allocation2 + $0x60] sm:$0xff]
        %v639 = vld [vmem:[#allocation2 + $0x70] sm:$0xff]
        %v640 = vld [vmem:[#allocation8] sm:$0x1]
        %v641 = vlaneseq
        %v642 = vshrl.u32 %v641, 7
        %v643 = vsub.s32 0, %v642
        %v644 = vrot.slane %v640, %v643
        %v645 = vmul.f32 %v632, %v644
        %v646 = vmul.f32 %v633, %v644
        %v647 = vmul.f32 %v634, %v644
        %v648 = vmul.f32 %v635, %v644
        %v649 = vmul.f32 %v636, %v644
        %v650 = vmul.f32 %v637, %v644
        %v651 = vmul.f32 %v638, %v644
        %v652 = vmul.f32 %v639, %v644
        %v653 = vadd.f32 %v645, 0.0
        %v654 = vadd.f32 %v646, 0.0
        %v655 = vadd.f32 %v647, 0.0
        %v656 = vadd.f32 %v648, 0.0
        %v657 = vadd.f32 %v649, 0.0
        %v658 = vadd.f32 %v650, 0.0
        %v659 = vadd.f32 %v651, 0.0
        %v660 = vadd.f32 %v652, 0.0
        %v661 = vld [vmem:[#allocation2 + $0x1] sm:$0xff]
        %v662 = vld [vmem:[#allocation2 + $0x11] sm:$0xff]
        %v663 = vld [vmem:[#allocation2 + $0x21] sm:$0xff]
        %v664 = vld [vmem:[#allocation2 + $0x31] sm:$0xff]
        %v665 = vld [vmem:[#allocation2 + $0x41] sm:$0xff]
        %v666 = vld [vmem:[#allocation2 + $0x51] sm:$0xff]
        %v667 = vld [vmem:[#allocation2 + $0x61] sm:$0xff]
        %v668 = vld [vmem:[#allocation2 + $0x71] sm:$0xff]
        %v669 = vld [vmem:[#allocation8 + $0x1] sm:$0x1]
        %v670 = vlaneseq
        %v671 = vshrl.u32 %v670, 7
        %v672 = vsub.s32 0, %v671
        %v673 = vrot.slane %v669, %v672
        %v674 = vmul.f32 %v661, %v673
        %v675 = vmul.f32 %v662, %v673
        %v676 = vmul.f32 %v663, %v673
        %v677 = vmul.f32 %v664, %v673
        %v678 = vmul.f32 %v665, %v673
        %v679 = vmul.f32 %v666, %v673
        %v680 = vmul.f32 %v667, %v673
        %v681 = vmul.f32 %v668, %v673
        %v682 = vadd.f32 %v653, %v674
        %v683 = vadd.f32 %v654, %v675
        %v684 = vadd.f32 %v655, %v676
        %v685 = vadd.f32 %v656, %v677
        %v686 = vadd.f32 %v657, %v678
        %v687 = vadd.f32 %v658, %v679
        %v688 = vadd.f32 %v659, %v680
        %v689 = vadd.f32 %v660, %v681
        %v690 = vld [vmem:[#allocation2 + $0x2] sm:$0xff]
        %v691 = vld [vmem:[#allocation2 + $0x12] sm:$0xff]
        %v692 = vld [vmem:[#allocation2 + $0x22] sm:$0xff]
        %v693 = vld [vmem:[#allocation2 + $0x32] sm:$0xff]
        %v694 = vld [vmem:[#allocation2 + $0x42] sm:$0xff]
        %v695 = vld [vmem:[#allocation2 + $0x52] sm:$0xff]
        %v696 = vld [vmem:[#allocation2 + $0x62] sm:$0xff]
        %v697 = vld [vmem:[#allocation2 + $0x72] sm:$0xff]
        %v698 = vld [vmem:[#allocation8 + $0x2] sm:$0x1]
        %v699 = vlaneseq
        %v700 = vshrl.u32 %v699, 7
        %v701 = vsub.s32 0, %v700
        %v702 = vrot.slane %v698, %v701
        %v703 = vmul.f32 %v690, %v702
        %v704 = vmul.f32 %v691, %v702
        %v705 = vmul.f32 %v692, %v702
        %v706 = vmul.f32 %v693, %v702
        %v707 = vmul.f32 %v694, %v702
        %v708 = vmul.f32 %v695, %v702
        %v709 = vmul.f32 %v696, %v702
        %v710 = vmul.f32 %v697, %v702
        %v711 = vadd.f32 %v682, %v703
        %v712 = vadd.f32 %v683, %v704
        %v713 = vadd.f32 %v684, %v705
        %v714 = vadd.f32 %v685, %v706
        %v715 = vadd.f32 %v686, %v707
        %v716 = vadd.f32 %v687, %v708
        %v717 = vadd.f32 %v688, %v709
        %v718 = vadd.f32 %v689, %v710
        %s719 = scalar_lea.vmem [#allocation2], 16
        %v720 = vld [vmem:[%s719] sm:$0xff]
        %v721 = vld [vmem:[%s719 + $0x10] sm:$0xff]
        %v722 = vld [vmem:[%s719 + $0x20] sm:$0xff]
        %v723 = vld [vmem:[%s719 + $0x30] sm:$0xff]
        %v724 = vld [vmem:[%s719 + $0x40] sm:$0xff]
        %v725 = vld [vmem:[%s719 + $0x50] sm:$0xff]
        %v726 = vld [vmem:[%s719 + $0x60] sm:$0xff]
        %v727 = vld [vmem:[%s719 + $0x70] sm:$0xff]
        %v728 = vld [vmem:[#allocation8 + $0x3] sm:$0x1]
        %v729 = vlaneseq
        %v730 = vshrl.u32 %v729, 7
        %v731 = vsub.s32 0, %v730
        %v732 = vrot.slane %v728, %v731
        %v733 = vmul.f32 %v720, %v732
        %v734 = vmul.f32 %v721, %v732
        %v735 = vmul.f32 %v722, %v732
        %v736 = vmul.f32 %v723, %v732
        %v737 = vmul.f32 %v724, %v732
        %v738 = vmul.f32 %v725, %v732
        %v739 = vmul.f32 %v726, %v732
        %v740 = vmul.f32 %v727, %v732
        %v741 = vadd.f32 %v711, %v733
        %v742 = vadd.f32 %v712, %v734
        %v743 = vadd.f32 %v713, %v735
        %v744 = vadd.f32 %v714, %v736
        %v745 = vadd.f32 %v715, %v737
        %v746 = vadd.f32 %v716, %v738
        %v747 = vadd.f32 %v717, %v739
        %v748 = vadd.f32 %v718, %v740
        %v749 = vld [vmem:[%s719 + $0x1] sm:$0xff]
        %v750 = vld [vmem:[%s719 + $0x11] sm:$0xff]
        %v751 = vld [vmem:[%s719 + $0x21] sm:$0xff]
        %v752 = vld [vmem:[%s719 + $0x31] sm:$0xff]
        %v753 = vld [vmem:[%s719 + $0x41] sm:$0xff]
        %v754 = vld [vmem:[%s719 + $0x51] sm:$0xff]
        %v755 = vld [vmem:[%s719 + $0x61] sm:$0xff]
        %v756 = vld [vmem:[%s719 + $0x71] sm:$0xff]
        %v757 = vld [vmem:[#allocation8 + $0x4] sm:$0x1]
        %v758 = vlaneseq
        %v759 = vshrl.u32 %v758, 7
        %v760 = vsub.s32 0, %v759
        %v761 = vrot.slane %v757, %v760
        %v762 = vmul.f32 %v749, %v761
        %v763 = vmul.f32 %v750, %v761
        %v764 = vmul.f32 %v751, %v761
        %v765 = vmul.f32 %v752, %v761
        %v766 = vmul.f32 %v753, %v761
        %v767 = vmul.f32 %v754, %v761
        %v768 = vmul.f32 %v755, %v761
        %v769 = vmul.f32 %v756, %v761
        %v770 = vadd.f32 %v741, %v762
        %v771 = vadd.f32 %v742, %v763
        %v772 = vadd.f32 %v743, %v764
        %v773 = vadd.f32 %v744, %v765
        %v774 = vadd.f32 %v745, %v766
        %v775 = vadd.f32 %v746, %v767
        %v776 = vadd.f32 %v747, %v768
        %v777 = vadd.f32 %v748, %v769
        %v778 = vld [vmem:[%s719 + $0x2] sm:$0xff]
        %v779 = vld [vmem:[%s719 + $0x12] sm:$0xff]
        %v780 = vld [vmem:[%s719 + $0x22] sm:$0xff]
        %v781 = vld [vmem:[%s719 + $0x32] sm:$0xff]
        %v782 = vld [vmem:[%s719 + $0x42] sm:$0xff]
        %v783 = vld [vmem:[%s719 + $0x52] sm:$0xff]
        %v784 = vld [vmem:[%s719 + $0x62] sm:$0xff]
        %v785 = vld [vmem:[%s719 + $0x72] sm:$0xff]
        %v786 = vld [vmem:[#allocation8 + $0x5] sm:$0x1]
        %v787 = vlaneseq
        %v788 = vshrl.u32 %v787, 7
        %v789 = vsub.s32 0, %v788
        %v790 = vrot.slane %v786, %v789
        %v791 = vmul.f32 %v778, %v790
        %v792 = vmul.f32 %v779, %v790
        %v793 = vmul.f32 %v780, %v790
        %v794 = vmul.f32 %v781, %v790
        %v795 = vmul.f32 %v782, %v790
        %v796 = vmul.f32 %v783, %v790
        %v797 = vmul.f32 %v784, %v790
        %v798 = vmul.f32 %v785, %v790
        %v799 = vadd.f32 %v770, %v791
        %v800 = vadd.f32 %v771, %v792
        %v801 = vadd.f32 %v772, %v793
        %v802 = vadd.f32 %v773, %v794
        %v803 = vadd.f32 %v774, %v795
        %v804 = vadd.f32 %v775, %v796
        %v805 = vadd.f32 %v776, %v797
        %v806 = vadd.f32 %v777, %v798
        %s807 = scalar_lea.vmem [#allocation2], 32
        %v808 = vld [vmem:[%s807] sm:$0xff]
        %v809 = vld [vmem:[%s807 + $0x10] sm:$0xff]
        %v810 = vld [vmem:[%s807 + $0x20] sm:$0xff]
        %v811 = vld [vmem:[%s807 + $0x30] sm:$0xff]
        %v812 = vld [vmem:[%s807 + $0x40] sm:$0xff]
        %v813 = vld [vmem:[%s807 + $0x50] sm:$0xff]
        %v814 = vld [vmem:[%s807 + $0x60] sm:$0xff]
        %v815 = vld [vmem:[%s807 + $0x70] sm:$0xff]
        %v816 = vld [vmem:[#allocation8 + $0x6] sm:$0x1]
        %v817 = vlaneseq
        %v818 = vshrl.u32 %v817, 7
        %v819 = vsub.s32 0, %v818
        %v820 = vrot.slane %v816, %v819
        %v821 = vmul.f32 %v808, %v820
        %v822 = vmul.f32 %v809, %v820
        %v823 = vmul.f32 %v810, %v820
        %v824 = vmul.f32 %v811, %v820
        %v825 = vmul.f32 %v812, %v820
        %v826 = vmul.f32 %v813, %v820
        %v827 = vmul.f32 %v814, %v820
        %v828 = vmul.f32 %v815, %v820
        %v829 = vadd.f32 %v799, %v821
        %v830 = vadd.f32 %v800, %v822
        %v831 = vadd.f32 %v801, %v823
        %v832 = vadd.f32 %v802, %v824
        %v833 = vadd.f32 %v803, %v825
        %v834 = vadd.f32 %v804, %v826
        %v835 = vadd.f32 %v805, %v827
        %v836 = vadd.f32 %v806, %v828
        %v837 = vld [vmem:[%s807 + $0x1] sm:$0xff]
        %v838 = vld [vmem:[%s807 + $0x11] sm:$0xff]
        %v839 = vld [vmem:[%s807 + $0x21] sm:$0xff]
        %v840 = vld [vmem:[%s807 + $0x31] sm:$0xff]
        %v841 = vld [vmem:[%s807 + $0x41] sm:$0xff]
        %v842 = vld [vmem:[%s807 + $0x51] sm:$0xff]
        %v843 = vld [vmem:[%s807 + $0x61] sm:$0xff]
        %v844 = vld [vmem:[%s807 + $0x71] sm:$0xff]
        %v845 = vld [vmem:[#allocation8 + $0x7] sm:$0x1]
        %v846 = vlaneseq
        %v847 = vshrl.u32 %v846, 7
        %v848 = vsub.s32 0, %v847
        %v849 = vrot.slane %v845, %v848
        %v850 = vmul.f32 %v837, %v849
        %v851 = vmul.f32 %v838, %v849
        %v852 = vmul.f32 %v839, %v849
        %v853 = vmul.f32 %v840, %v849
        %v854 = vmul.f32 %v841, %v849
        %v855 = vmul.f32 %v842, %v849
        %v856 = vmul.f32 %v843, %v849
        %v857 = vmul.f32 %v844, %v849
        %v858 = vadd.f32 %v829, %v850
        %v859 = vadd.f32 %v830, %v851
        %v860 = vadd.f32 %v831, %v852
        %v861 = vadd.f32 %v832, %v853
        %v862 = vadd.f32 %v833, %v854
        %v863 = vadd.f32 %v834, %v855
        %v864 = vadd.f32 %v835, %v856
        %v865 = vadd.f32 %v836, %v857
        %v866 = vld [vmem:[%s807 + $0x2] sm:$0xff]
        %v867 = vld [vmem:[%s807 + $0x12] sm:$0xff]
        %v868 = vld [vmem:[%s807 + $0x22] sm:$0xff]
        %v869 = vld [vmem:[%s807 + $0x32] sm:$0xff]
        %v870 = vld [vmem:[%s807 + $0x42] sm:$0xff]
        %v871 = vld [vmem:[%s807 + $0x52] sm:$0xff]
        %v872 = vld [vmem:[%s807 + $0x62] sm:$0xff]
        %v873 = vld [vmem:[%s807 + $0x72] sm:$0xff]
        %v874 = vld [vmem:[#allocation8 + $0x8] sm:$0x1]
        %v875 = vlaneseq
        %v876 = vshrl.u32 %v875, 7
        %v877 = vsub.s32 0, %v876
        %v878 = vrot.slane %v874, %v877
        %v879 = vmul.f32 %v866, %v878
        %v880 = vmul.f32 %v867, %v878
        %v881 = vmul.f32 %v868, %v878
        %v882 = vmul.f32 %v869, %v878
        %v883 = vmul.f32 %v870, %v878
        %v884 = vmul.f32 %v871, %v878
        %v885 = vmul.f32 %v872, %v878
        %v886 = vmul.f32 %v873, %v878
        %v887 = vadd.f32 %v858, %v879
        %v888 = vadd.f32 %v859, %v880
        %v889 = vadd.f32 %v860, %v881
        %v890 = vadd.f32 %v861, %v882
        %v891 = vadd.f32 %v862, %v883
        %v892 = vadd.f32 %v863, %v884
        %v893 = vadd.f32 %v864, %v885
        %v894 = vadd.f32 %v865, %v886
        %v895 = vld [vmem:[%s4] sm:$0x1]
        %v897 = vlaneseq
        %v898 = vshrl.u32 %v897, 7
        %v899 = vsub.s32 0, %v898
        %v900 = vrot.slane %v895, %v899
        %v902 = vadd.f32 %v887, %v900
        %v903 = vadd.f32 %v888, %v900
        %v904 = vadd.f32 %v889, %v900
        %v905 = vadd.f32 %v890, %v900
        %v906 = vadd.f32 %v891, %v900
        %v907 = vadd.f32 %v892, %v900
        %v908 = vadd.f32 %v893, %v900
        %v909 = vadd.f32 %v894, %v900
        %v910 = vmax.f32 %v902, 0.0
        %v911 = vmax.f32 %v903, 0.0
        %v912 = vmax.f32 %v904, 0.0
        %v913 = vmax.f32 %v905, 0.0
        %v914 = vmax.f32 %v906, 0.0
        %v915 = vmax.f32 %v907, 0.0
        %v916 = vmax.f32 %v908, 0.0
        %v917 = vmax.f32 %v909, 0.0
        %v918 = vld [vmem:[#allocation9] sm:$0xff]
        %v919 = vld [vmem:[#allocation9 + $0x8] sm:$0xff]
        %v920 = vld [vmem:[#allocation9 + $0x10] sm:$0xff]
        %v921 = vld [vmem:[#allocation9 + $0x18] sm:$0xff]
        %v922 = vld [vmem:[#allocation9 + $0x20] sm:$0xff]
        %v923 = vld [vmem:[#allocation9 + $0x28] sm:$0xff]
        %v924 = vld [vmem:[#allocation9 + $0x30] sm:$0xff]
        %v925 = vld [vmem:[#allocation9 + $0x38] sm:$0xff]
        %v926 = vld [vmem:[#allocation9 + $0x40] sm:$0xff]
        %v927 = vld [vmem:[#allocation9 + $0x48] sm:$0xff]
        %v928 = vld [vmem:[#allocation9 + $0x50] sm:$0xff]
        %v929 = vld [vmem:[#allocation9 + $0x58] sm:$0xff]
        %v930 = vld [vmem:[#allocation9 + $0x60] sm:$0xff]
        %v931 = vld [vmem:[#allocation9 + $0x68] sm:$0xff]
        %v932 = vld [vmem:[#allocation9 + $0x70] sm:$0xff]
        %v933 = vld [vmem:[#allocation9 + $0x78] sm:$0xff]
        %v934 = vld [vmem:[%s6] sm:$0x1]
        %v936 = vlaneseq
        %v937 = vshrl.u32 %v936, 7
        %v938 = vsub.s32 0, %v937
        %v939 = vrot.slane %v934, %v938
        %941 = vmatprep.subr.mxu0 0.0
        %942 = vmatpush1.msra.mxu0 %v933
        %943 = vmatprep.subr.mxu0 0.0
        %944 = vmatpush1.msra.mxu0 %v932
        %945 = vmatprep.subr.mxu0 0.0
        %946 = vmatpush1.msra.mxu0 %v931
        %947 = vmatprep.subr.mxu0 0.0
        %948 = vmatpush1.msra.mxu0 %v930
        %949 = vmatprep.subr.mxu0 0.0
        %950 = vmatpush1.msra.mxu0 %v929
        %951 = vmatprep.subr.mxu0 0.0
        %952 = vmatpush1.msra.mxu0 %v928
        %953 = vmatprep.subr.mxu0 0.0
        %954 = vmatpush1.msra.mxu0 %v927
        %955 = vmatprep.subr.mxu0 0.0
        %956 = vmatpush1.msra.mxu0 %v926
        %957 = vmatprep.subr.mxu0 0.0
        %958 = vmatpush1.msra.mxu0 %v925
        %959 = vmatprep.subr.mxu0 0.0
        %960 = vmatpush1.msra.mxu0 %v924
        %961 = vmatprep.subr.mxu0 0.0
        %962 = vmatpush1.msra.mxu0 %v923
        %963 = vmatprep.subr.mxu0 0.0
        %964 = vmatpush1.msra.mxu0 %v922
        %965 = vmatprep.subr.mxu0 0.0
        %966 = vmatpush1.msra.mxu0 %v921
        %967 = vmatprep.subr.mxu0 0.0
        %968 = vmatpush1.msra.mxu0 %v920
        %969 = vmatprep.subr.mxu0 0.0
        %970 = vmatpush1.msra.mxu0 %v919
        %971 = vmatprep.subr.mxu0 0.0
        %972 = vmatpush1.msra.mxu0 %v918
        %973 = vmatprep.subr.mxu0 0.0
        %974 = vmatpush2.msra.mxu0 0.0
        %975 = vmatprep.subr.mxu0 0.0
        %976 = vmatpush2.msra.mxu0 0.0
        %977 = vmatprep.subr.mxu0 0.0
        %978 = vmatpush2.msra.mxu0 0.0
        %979 = vmatprep.subr.mxu0 0.0
        %980 = vmatpush2.msra.mxu0 0.0
        %981 = vmatprep.subr.mxu0 0.0
        %982 = vmatpush2.msra.mxu0 0.0
        %983 = vmatprep.subr.mxu0 0.0
        %984 = vmatpush2.msra.mxu0 0.0
        %985 = vmatprep.subr.mxu0 0.0
        %986 = vmatpush2.msra.mxu0 0.0
        %987 = vmatprep.subr.mxu0 0.0
        %988 = vmatpush2.msra.mxu0 0.0
        %989 = vmatprep.subr.mxu0 0.0
        %990 = vmatpush2.msra.mxu0 0.0
        %991 = vmatprep.subr.mxu0 0.0
        %992 = vmatpush2.msra.mxu0 0.0
        %993 = vmatprep.subr.mxu0 0.0
        %994 = vmatpush2.msra.mxu0 0.0
        %995 = vmatprep.subr.mxu0 0.0
        %996 = vmatpush2.msra.mxu0 0.0
        %997 = vmatprep.subr.mxu0 0.0
        %998 = vmatpush2.msra.mxu0 0.0
        %999 = vmatprep.subr.mxu0 0.0
        %1000 = vmatpush2.msra.mxu0 0.0
        %1001 = vmatprep.subr.mxu0 0.0
        %1002 = vmatpush2.msra.mxu0 0.0
        %1003 = vmatprep.subr.mxu0 0.0
        %1004 = vmatpush2.msra.mxu0 0.0
        %1005 = vmatprep.mubr.f32.mxu0 0.0
        %1006 = vmatmul.mubr.f32.gmra.mxu0 %v910
        %v1007 = vpop.f32.mrf.mxu0
        %v1008 = vadd.f32 %v939, %v1007
        %v1009 = vpop.f32.mrf.mxu0
        %1010 = vmatprep.mubr.f32.mxu0 0.0
        %1011 = vmatmul.mubr.f32.gmra.mxu0 %v911
        %v1012 = vpop.f32.mrf.mxu0
        %v1013 = vadd.f32 %v939, %v1012
        %v1014 = vpop.f32.mrf.mxu0
        %1015 = vmatprep.mubr.f32.mxu0 0.0
        %1016 = vmatmul.mubr.f32.gmra.mxu0 %v912
        %v1017 = vpop.f32.mrf.mxu0
        %v1018 = vadd.f32 %v939, %v1017
        %v1019 = vpop.f32.mrf.mxu0
        %1020 = vmatprep.mubr.f32.mxu0 0.0
        %1021 = vmatmul.mubr.f32.gmra.mxu0 %v913
        %v1022 = vpop.f32.mrf.mxu0
        %v1023 = vadd.f32 %v939, %v1022
        %v1024 = vpop.f32.mrf.mxu0
        %1025 = vmatprep.mubr.f32.mxu0 0.0
        %1026 = vmatmul.mubr.f32.gmra.mxu0 %v914
        %v1027 = vpop.f32.mrf.mxu0
        %v1028 = vadd.f32 %v939, %v1027
        %v1029 = vpop.f32.mrf.mxu0
        %1030 = vmatprep.mubr.f32.mxu0 0.0
        %1031 = vmatmul.mubr.f32.gmra.mxu0 %v915
        %v1032 = vpop.f32.mrf.mxu0
        %v1033 = vadd.f32 %v939, %v1032
        %v1034 = vpop.f32.mrf.mxu0
        %1035 = vmatprep.mubr.f32.mxu0 0.0
        %1036 = vmatmul.mubr.f32.gmra.mxu0 %v916
        %v1037 = vpop.f32.mrf.mxu0
        %v1038 = vadd.f32 %v939, %v1037
        %v1039 = vpop.f32.mrf.mxu0
        %1040 = vmatprep.mubr.f32.mxu0 0.0
        %1041 = vmatmul.mubr.f32.gmra.mxu0 %v917
        %v1042 = vpop.f32.mrf.mxu0
        %v1043 = vadd.f32 %v939, %v1042
        %v1044 = vpop.f32.mrf.mxu0
        %1045 = vdwg.mxu0
        %s1046 = scalar_lea.vmem %s298, 16 [#allocation3]
        %v1047 = vld [vmem:[%s1046 + $0x1] sm:$0xff]
        %v1048 = vld [vmem:[%s1046 + $0x11] sm:$0xff]
        %v1049 = vld [vmem:[%s1046 + $0x21] sm:$0xff]
        %v1050 = vld [vmem:[%s1046 + $0x31] sm:$0xff]
        %v1051 = vld [vmem:[%s1046 + $0x41] sm:$0xff]
        %v1052 = vld [vmem:[%s1046 + $0x51] sm:$0xff]
        %v1053 = vld [vmem:[%s1046 + $0x61] sm:$0xff]
        %v1054 = vld [vmem:[%s1046 + $0x71] sm:$0xff]
        %v1055 = vadd.f32 %v1008, %v1047
        %v1056 = vadd.f32 %v1013, %v1048
        %v1057 = vadd.f32 %v1018, %v1049
        %v1058 = vadd.f32 %v1023, %v1050
        %v1059 = vadd.f32 %v1028, %v1051
        %v1060 = vadd.f32 %v1033, %v1052
        %v1061 = vadd.f32 %v1038, %v1053
        %v1062 = vadd.f32 %v1043, %v1054
        %v1063 = vmax.f32 %v1055, 0.0
        %v1064 = vmax.f32 %v1056, 0.0
        %v1065 = vmax.f32 %v1057, 0.0
        %v1066 = vmax.f32 %v1058, 0.0
        %v1067 = vmax.f32 %v1059, 0.0
        %v1068 = vmax.f32 %v1060, 0.0
        %v1069 = vmax.f32 %v1061, 0.0
        %v1070 = vmax.f32 %v1062, 0.0
        %1071 = vst [vmem:[%s340] sm:$0xff] %v1063
        %1072 = vst [vmem:[%s340 + $0x8] sm:$0xff] %v1064
        %1073 = vst [vmem:[%s340 + $0x10] sm:$0xff] %v1065
        %1074 = vst [vmem:[%s340 + $0x18] sm:$0xff] %v1066
        %1075 = vst [vmem:[%s340 + $0x20] sm:$0xff] %v1067
        %1076 = vst [vmem:[%s340 + $0x28] sm:$0xff] %v1068
        %1077 = vst [vmem:[%s340 + $0x30] sm:$0xff] %v1069
        %1078 = vst [vmem:[%s340 + $0x38] sm:$0xff] %v1070
        %s1079 = sand.u32 %s186, 1
        %s1080 = scalar_lea.sflag [#allocation5], %s1079
        %s1081 = sand.u32 %s186, 1
        %s1082 = smul.addr %s1081, 64
        %s1083 = scalar_lea.vmem [#allocation11], %s1082
        // Predicated region
        $region65: #{tpu_custom_call.1} parent=47 // pred_check
          %p1084 = pneg %p196
        $region66: #{tpu_custom_call.1} parent=47 // pred_check_branch
          %1086 = sbr.rel (%p1084) target = $region68
        $region67: #{tpu_custom_call.1} parent=47 // pred_region
          %s1088 = ssub.s32 1024, 1024
          %1089 = vsyncadd %s1080, %s1088
          %s1090 = smul.addr %s26, 8
          %s1091 = smul.addr %s1090, 128
          %s1092 = scalar_lea.hbm %s7, %s1091
          %s1093 = sshll.u32 %s1083, 4
          %s1094 = int_to_ptr.vmem [resolvable:$true] %s1093
          %1099 = dma.vmem_to_hbm [thread:$0]  %s1094, 1024, %s1092, %s1080, 128, 128, 8
        $region68: #{tpu_custom_call.1} parent=47 // pred_fallthru
          _
      $region48: #{tpu_custom_call.1} parent=5 // pred_fallthru
        _
      %p1100 = scmp.le.s32.totalorder 2, %s21
      // Predicated region
      $region69: #{tpu_custom_call.1} parent=5 // pred_check
        %p1101 = pneg %p1100
      $region70: #{tpu_custom_call.1} parent=5 // pred_check_branch
        %1103 = sbr.rel (%p1101) target = $region72
      $region71: #{tpu_custom_call.1} parent=5 // pred_region
        %s1104 = ssub.s32 %s21, 2
        // Predicated region
        $region73: #{tpu_custom_call.1} parent=71 // pred_check
          %p1105 = pneg %p202
        $region74: #{tpu_custom_call.1} parent=71 // pred_check_branch
          %1107 = sbr.rel (%p1105) target = $region76
        $region75: #{tpu_custom_call.1} parent=71 // pred_region
          %s1108 = sand.u32 %s187, 1
          %s1109 = scalar_lea.sflag [#allocation5], %s1108
          %s1110 = sand.u32 %s187, 1
          %s1111 = smul.addr %s1110, 64
          %s1112 = scalar_lea.vmem [#allocation11], %s1111
          %1113 = dma.done %s1109, 1024
        $region76: #{tpu_custom_call.1} parent=71 // pred_fallthru
          _
      $region72: #{tpu_custom_call.1} parent=5 // pred_fallthru
        _
    $region6: #{tpu_custom_call.1} parent=1 // loop_footer
      %s25 = sadd.s32 1, %s21
    $region7: #{tpu_custom_call.1} parent=1 // loop_footer_branch
      %20 = sbr.rel target = $region3
    $region8: #{tpu_custom_call.1} parent=1 // loop_exit
      _
    %1114 = vsyncpa [#allocation4], 1
    %s1115 = scalar_lea.sflag [#allocation4], 1
    %1116 = vsyncpa %s1115, 1
    %1117 = vsyncpa [#allocation7], 1
    %1118 = vsyncpa [#allocation10], 1
    %1119 = vsyncpa [#allocation5], 1
    %s1120 = scalar_lea.sflag [#allocation5], 1
    %1121 = vsyncpa %s1120, 1

</llo_original>
